<compile_context>
chip_gen: v5e
topology: v5e:2x2
jax: 0.10.0
libtpu: 0.0.40
codegen_flags: <defaults>
</compile_context>

<pallas_src>
import functools

import jax
import jax.numpy as jnp
from jax import lax
from jax.experimental import pallas as pl
from jax.experimental.pallas import tpu as pltpu


# --------------------------------------------------------------------------
# Kernel 1: K/V projection only (q is fused into the attention kernel).
# --------------------------------------------------------------------------
def _kv_proj_kernel(x_ref, wkv_ref, k_ref, v_ref, *, dim):
    # x_ref: (tr, D) bf16, wkv_ref: (D, 2D) bf16
    kvp = jnp.dot(x_ref[...], wkv_ref[...],
                  preferred_element_type=jnp.float32)        # (tr, 2D) f32
    k_ref[...] = kvp[:, :dim].astype(k_ref.dtype)
    v_ref[...] = kvp[:, dim:].astype(v_ref.dtype)


# --------------------------------------------------------------------------
# Kernel 2: fused q projection + flash attention (online softmax over KV
# blocks) + single full-D output projection, with exact attention output.
# --------------------------------------------------------------------------
def _attn_kernel(x_ref, wq_ref, k_ref, v_ref, wout_ref, bout_ref,
                 out_ref, attn_ref,
                 q_scr, m_scr, l_scr, acc_scr, p_scr, mh_scr,
                 *, heads, head_dim, scale, tkv, n_kv):
    kv = pl.program_id(2)

    @pl.when(kv == 0)
    def _init():
        # q for this q-tile, computed once; scale folded in before the bf16 cast.
        q = jnp.dot(x_ref[...], wq_ref[...], preferred_element_type=jnp.float32)
        q_scr[...] = (q * scale).astype(q_scr.dtype)
        m_scr[...] = jnp.full(m_scr.shape, -jnp.inf, m_scr.dtype)
        l_scr[...] = jnp.zeros(l_scr.shape, l_scr.dtype)
        acc_scr[...] = jnp.zeros(acc_scr.shape, acc_scr.dtype)

    # TODO(synk): attn_mask support (masked_fill -1e9 before softmax) not implemented.
    for h in range(heads):                      # static loop, heads is small
        lo, hi = h * head_dim, (h + 1) * head_dim
        q_h = q_scr[:, lo:hi]                   # (tq, hd) bf16, 128-aligned lane slice
        k_h = k_ref[:, lo:hi]                   # (tkv, hd) bf16
        # s[t, s'] = sum_d q_h[t, d] * k_h[s', d]   (scale already folded into q)
        s = lax.dot_general(q_h, k_h, (((1,), (1,)), ((), ())),
                            preferred_element_type=jnp.float32)    # (tq, tkv) f32
        m_prev = m_scr[h]                                          # (tq, 1)
        m_new = jnp.maximum(m_prev, jnp.max(s, axis=-1, keepdims=True))
        alpha = jnp.exp(m_prev - m_new)
        p = jnp.exp(s - m_new)                                     # (tq, tkv) f32
        l_scr[h] = alpha * l_scr[h] + jnp.sum(p, axis=-1, keepdims=True)
        pv = jnp.dot(p.astype(v_ref.dtype), v_ref[:, lo:hi],
                     preferred_element_type=jnp.float32)           # (tq, hd) f32
        acc_scr[:, lo:hi] = alpha * acc_scr[:, lo:hi] + pv
        m_scr[h] = m_new
        # Stage the (still running-max-referenced) probabilities and their max
        # so the exact attention map can be renormalized once at finalize.
        slot = kv * heads + h                   # dynamic *leading*-dim index only
        p_scr[pl.ds(slot, 1)] = p[None]
        mh_scr[pl.ds(slot, 1)] = m_new[None]

    @pl.when(kv == n_kv - 1)
    def _finalize():
        for h in range(heads):
            lo, hi = h * head_dim, (h + 1) * head_dim
            m_fin = m_scr[h]                    # (tq, 1) = global row max
            inv_l = 1.0 / l_scr[h]              # exact reciprocal -> rows sum to 1
            acc_scr[:, lo:hi] = acc_scr[:, lo:hi] * inv_l
            for j in range(n_kv):               # static slices at finalize
                slot = j * heads + h
                corr = jnp.exp(mh_scr[slot] - m_fin) * inv_l       # (tq, 1)
                attn_ref[h, :, j * tkv:(j + 1) * tkv] = (
                    p_scr[slot] * corr).astype(attn_ref.dtype)
        # Single full-D output projection (one K=D MXU job) + bias, in f32.
        o_bf = acc_scr[...].astype(wout_ref.dtype)                 # (tq, D) bf16
        out_ref[...] = (jnp.dot(o_bf, wout_ref[...],
                                preferred_element_type=jnp.float32)
                        + bout_ref[...]).astype(out_ref.dtype)


def attention_forward(x, w_qkv, w_out, b_out, heads, *, tq=256, tkv=256,
                      attn_dtype=jnp.float32):
    N, T, D = x.shape
    assert D % heads == 0, "dim must be divisible by heads"
    hd = D // heads
    # Lane-aligned per-head slices of q/k/v/acc require head_dim % 128 == 0.
    # TODO(synk): pack two 64-wide heads per 128-lane group to support hd=64.
    assert hd % 128 == 0, "head_dim must be a multiple of 128 for this kernel"
    scale = float(hd) ** (-0.5)
    tq = min(tq, T)
    tkv = min(tkv, T)
    assert T % tq == 0 and T % tkv == 0, "T must be divisible by the tile sizes"
    n_q, n_kv = T // tq, T // tkv

    # bf16 MXU operands; softmax / accumulation / bias in f32.
    xb = x.astype(jnp.bfloat16)
    wqkvb = w_qkv.astype(jnp.bfloat16)
    w_q = wqkvb[:, :D]          # (D, D)   q projection (used inside kernel 2)
    w_kv = wqkvb[:, D:]         # (D, 2D)  k/v projection (kernel 1)
    woutb = w_out.astype(jnp.bfloat16)
    boutf = b_out.astype(jnp.float32)

    # Adaptive VMEM budget: large on 128-MiB parts (v5e/v6e), conservative
    # fallback that is valid on v7x's 64-MiB VMEM.
    try:
        vmem_cap = pltpu.get_tpu_info().vmem_capacity_bytes
    except Exception:
        vmem_cap = 64 * 1024 * 1024
    vmem_limit = min(100 * 1024 * 1024, int(vmem_cap * 0.9))

    # ---- kernel 1: K/V projection -----------------------------------------
    kv_kernel = functools.partial(_kv_proj_kernel, dim=D)
    k, v = pl.pallas_call(
        kv_kernel,
        out_shape=(
            jax.ShapeDtypeStruct((N, T, D), jnp.bfloat16),
            jax.ShapeDtypeStruct((N, T, D), jnp.bfloat16),
        ),
        grid=(N, n_q),
        in_specs=[
            pl.BlockSpec((pl.Squeezed(), tq, D), lambda n, i: (n, i, 0)),
            pl.BlockSpec((D, 2 * D), lambda n, i: (0, 0)),
        ],
        out_specs=(
            pl.BlockSpec((pl.Squeezed(), tq, D), lambda n, i: (n, i, 0)),
            pl.BlockSpec((pl.Squeezed(), tq, D), lambda n, i: (n, i, 0)),
        ),
        compiler_params=pltpu.CompilerParams(
            dimension_semantics=("parallel", "parallel"),
            vmem_limit_bytes=vmem_limit),
    )(xb, w_kv)

    # ---- kernel 2: flash attention + q projection + output projection ------
    attn_kernel = functools.partial(_attn_kernel, heads=heads, head_dim=hd,
                                    scale=scale, tkv=tkv, n_kv=n_kv)
    out, attn = pl.pallas_call(
        attn_kernel,
        out_shape=(
            jax.ShapeDtypeStruct((N, T, D), jnp.float32),
            jax.ShapeDtypeStruct((N, heads, T, T), attn_dtype),
        ),
        grid=(N, n_q, n_kv),
        in_specs=[
            pl.BlockSpec((pl.Squeezed(), tq, D), lambda n, i, j: (n, i, 0)),    # x q-tile
            pl.BlockSpec((D, D), lambda n, i, j: (0, 0)),                       # W_q
            pl.BlockSpec((pl.Squeezed(), tkv, D), lambda n, i, j: (n, j, 0)),   # K block
            pl.BlockSpec((pl.Squeezed(), tkv, D), lambda n, i, j: (n, j, 0)),   # V block
            pl.BlockSpec((D, D), lambda n, i, j: (0, 0)),                       # W_out
            pl.BlockSpec((1, D), lambda n, i, j: (0, 0)),                       # b_out
        ],
        out_specs=(
            pl.BlockSpec((pl.Squeezed(), tq, D), lambda n, i, j: (n, i, 0)),
            pl.BlockSpec((pl.Squeezed(), heads, tq, T), lambda n, i, j: (n, 0, i, 0)),
        ),
        scratch_shapes=[
            pltpu.VMEM((tq, D), jnp.bfloat16),                    # cached scaled q
            pltpu.VMEM((heads, tq, 1), jnp.float32),              # running max
            pltpu.VMEM((heads, tq, 1), jnp.float32),              # running denom
            pltpu.VMEM((tq, D), jnp.float32),                     # output accumulator
            pltpu.VMEM((n_kv * heads, tq, tkv), jnp.float32),     # staged probs
            pltpu.VMEM((n_kv * heads, tq, 1), jnp.float32),       # per-block max
        ],
        compiler_params=pltpu.CompilerParams(
            dimension_semantics=("parallel", "parallel", "arbitrary"),
            vmem_limit_bytes=vmem_limit),
    )(xb, w_q, k, v, woutb, boutf)
    return out, attn


def reference_forward(x, w_qkv, w_out, b_out, heads):
    """Pure-JAX f32 reference mirroring the PyTorch forward (dropout=0, no mask)."""
    N, T, D = x.shape
    hd = D // heads
    scale = float(hd) ** (-0.5)
    qkv = x @ w_qkv
    q, k, v = jnp.split(qkv, 3, axis=-1)

    def to_heads(t):
        return jnp.transpose(t.reshape(N, T, heads, hd), (0, 2, 1, 3))

    q, k, v = map(to_heads, (q, k, v))
    dots = jnp.einsum('nhtd,nhsd->nhts', q, k) * scale
    attn = jax.nn.softmax(dots, axis=-1)
    out = jnp.einsum('nhts,nhsd->nhtd', attn, v)
    out = jnp.transpose(out, (0, 2, 1, 3)).reshape(N, T, D)
    out = out @ w_out + b_out[0]
    return out, attn


if __name__ == "__main__":
    # Small but MXU-/lane-friendly shapes; T=512 with tq=tkv=256 exercises the
    # multi-block online-softmax path (n_q=2, n_kv=2) and head_dim=128.
    N, T, D, H = 2, 512, 256, 2

    key = jax.random.PRNGKey(0)
    kx, k1, k2, k3 = jax.random.split(key, 4)

    x = jax.random.normal(kx, (N, T, D), dtype=jnp.float32)

    # PyTorch-like Linear init: U(-1/sqrt(fan_in), 1/sqrt(fan_in)); deterministic.
    bound = 1.0 / (D ** 0.5)
    w_qkv = jax.random.uniform(k1, (D, 3 * D), jnp.float32, -bound, bound)
    w_out = jax.random.uniform(k2, (D, D), jnp.float32, -bound, bound)
    b_out = jax.random.uniform(k3, (1, D), jnp.float32, -bound, bound)

    out, attn = attention_forward(x, w_qkv, w_out, b_out, H)
    out, attn = jax.block_until_ready((out, attn))

    out_exp, attn_exp = reference_forward(x, w_qkv, w_out, b_out, H)
    assert out.shape == (N, T, D) and attn.shape == (N, H, T, T)
    # Exact finalize normalization -> attention rows sum to 1.
    assert jnp.allclose(jnp.sum(attn, axis=-1), 1.0, atol=2e-3)
    # bf16 MXU operands in the kernel -> looser tolerance vs the f32 reference.
    assert jnp.allclose(attn, attn_exp, atol=2e-2, rtol=2e-2)
    assert jnp.allclose(out, out_exp, atol=2e-2, rtol=2e-2)

    print("KERNEL_OK")
</pallas_src>

<mosaic_0001>
module attributes {stable_mosaic.version = 11 : i64} {
  func.func @_kv_proj_kernel(%arg0: i32, %arg1: i32, %arg2: memref<1x256x256xbf16, #tpu.memory_space<vmem>>, %arg3: memref<256x512xbf16, #tpu.memory_space<vmem>>, %arg4: memref<1x256x256xbf16, #tpu.memory_space<vmem>>, %arg5: memref<1x256x256xbf16, #tpu.memory_space<vmem>>) attributes {dimension_semantics = [#tpu.dimension_semantics<parallel>, #tpu.dimension_semantics<parallel>], iteration_bounds = array<i64: 2, 2>, scalar_prefetch = 0 : i64, scratch_operands = 0 : i64, tpu.core_type = #tpu.core_type<tc>, window_params = [{transform_indices = @transform_0, window_bounds = array<i64: 1, 256, 256>}, {pipeline_mode = #tpu.pipeline_mode<synchronous>, transform_indices = @transform_1, window_bounds = array<i64: 256, 512>}, {transform_indices = @transform_2, window_bounds = array<i64: 1, 256, 256>}, {transform_indices = @transform_3, window_bounds = array<i64: 1, 256, 256>}]} {
    %c0 = arith.constant 0 : index
    %c0_0 = arith.constant 0 : index
    %c0_1 = arith.constant 0 : index
    %0 = vector.load %arg2[%c0, %c0_0, %c0_1] : memref<1x256x256xbf16, #tpu.memory_space<vmem>>, vector<1x256x256xbf16>
    %1 = vector.shape_cast %0 : vector<1x256x256xbf16> to vector<256x256xbf16>
    %c0_2 = arith.constant 0 : index
    %c0_3 = arith.constant 0 : index
    %2 = vector.load %arg3[%c0_2, %c0_3] : memref<256x512xbf16, #tpu.memory_space<vmem>>, vector<256x512xbf16>
    %cst = arith.constant dense<0.000000e+00> : vector<256x512xf32>
    %3 = tpu.matmul %1, %2, %cst {dimension_numbers = #tpu.dot_dimension_numbers<[1], [0], [0], [1], [0, 0, 1, 1], [], []>} : vector<256x256xbf16>, vector<256x512xbf16>, vector<256x512xf32> -> vector<256x512xf32>
    %4 = vector.extract_strided_slice %3 {offsets = [0, 0], sizes = [256, 256], strides = [1, 1]} : vector<256x512xf32> to vector<256x256xf32>
    %5 = arith.truncf %4 : vector<256x256xf32> to vector<256x256xbf16>
    %c0_4 = arith.constant 0 : index
    %c0_5 = arith.constant 0 : index
    %c0_6 = arith.constant 0 : index
    %6 = vector.load %arg4[%c0_4, %c0_5, %c0_6] : memref<1x256x256xbf16, #tpu.memory_space<vmem>>, vector<1x256x256xbf16>
    %7 = vector.shape_cast %6 : vector<1x256x256xbf16> to vector<256x256xbf16>
    %8 = vector.shape_cast %5 : vector<256x256xbf16> to vector<1x256x256xbf16>
    tpu.vector_store %arg4[%c0_4, %c0_5, %c0_6], %8 {strides = array<i32>} : memref<1x256x256xbf16, #tpu.memory_space<vmem>>, vector<1x256x256xbf16>,
    %9 = vector.extract_strided_slice %3 {offsets = [0, 256], sizes = [256, 256], strides = [1, 1]} : vector<256x512xf32> to vector<256x256xf32>
    %10 = arith.truncf %9 : vector<256x256xf32> to vector<256x256xbf16>
    %c0_7 = arith.constant 0 : index
    %c0_8 = arith.constant 0 : index
    %c0_9 = arith.constant 0 : index
    %11 = vector.load %arg5[%c0_7, %c0_8, %c0_9] : memref<1x256x256xbf16, #tpu.memory_space<vmem>>, vector<1x256x256xbf16>
    %12 = vector.shape_cast %11 : vector<1x256x256xbf16> to vector<256x256xbf16>
    %13 = vector.shape_cast %10 : vector<256x256xbf16> to vector<1x256x256xbf16>
    tpu.vector_store %arg5[%c0_7, %c0_8, %c0_9], %13 {strides = array<i32>} : memref<1x256x256xbf16, #tpu.memory_space<vmem>>, vector<1x256x256xbf16>,
    return
  }
  func.func @transform_0(%arg0: i32, %arg1: i32) -> (i32, i32, i32) {
    %c0_i32 = arith.constant 0 : i32
    %c0_i32_0 = arith.constant 0 : i32
    return %arg0, %arg1, %c0_i32 : i32, i32, i32
  }
  func.func @transform_1(%arg0: i32, %arg1: i32) -> (i32, i32) {
    %c0_i32 = arith.constant 0 : i32
    %c0_i32_0 = arith.constant 0 : i32
    %c0_i32_1 = arith.constant 0 : i32
    return %c0_i32, %c0_i32_0 : i32, i32
  }
  func.func @transform_2(%arg0: i32, %arg1: i32) -> (i32, i32, i32) {
    %c0_i32 = arith.constant 0 : i32
    %c0_i32_0 = arith.constant 0 : i32
    return %arg0, %arg1, %c0_i32 : i32, i32, i32
  }
  func.func @transform_3(%arg0: i32, %arg1: i32) -> (i32, i32, i32) {
    %c0_i32 = arith.constant 0 : i32
    %c0_i32_0 = arith.constant 0 : i32
    return %arg0, %arg1, %c0_i32 : i32, i32, i32
  }
}

</mosaic_0001>

<llo_original>
// kernel: tpu_custom_call.1
$region0: #{tpu_custom_call.1}
  #allocation0 [shape = 'u32[]', space=smem, size = 0x4, offset = 0x4, fixed_abs, tag = 'smem constant byte address 0x4 - core index']
  #allocation1 [shape = 'u32[72,128]{1,0:T(1,128)}', space=vmem, size = 0x9000, scoped, tag = 'internal scratch']
  %s0 = inlined_call_operand.hbm [shape: bf16[2,512,256], index: 0, kind: input, shape index: {}]
  %s1 = inlined_call_operand.hbm [shape: bf16[256,512], index: 1, kind: input, shape index: {}]
  %s2 = inlined_call_operand.hbm [shape: bf16[2,512,256], index: 2, kind: output, shape index: {0}]
  %s3 = inlined_call_operand.hbm [shape: bf16[2,512,256], index: 3, kind: output, shape index: {1}]
  %4 = xla_tuple %s2, %s3
  %s5 = sld [smem:[#allocation0]]
  $region57: #{tpu_custom_call.1} parent=0
    _
  %s7 = ssub.s32 1, %s5
  %s8 = scalar_select 0, %s7, %s5
  $region1: #{tpu_custom_call.1} parent=0
    #allocation2 [shape = 'u8[262144]{0}', space=vmem, size = 0x40000, scoped, tag = 'input window, operand 0']
    #allocation3 [shape = 's32[2]{0}', space=sflag, size = 0x8, scoped, tag = 'scoped memory for tpu_custom_call.1']
    #allocation4 [shape = 's32[2]{0}', space=sflag, size = 0x8, scoped, tag = 'scoped memory for tpu_custom_call.1']
    #allocation5 [shape = 'u8[262144]{0}', space=vmem, size = 0x40000, scoped, tag = 'input window, operand 1, single buffered']
    #allocation6 [shape = 's32[1]{0}', space=sflag, size = 0x4, scoped, tag = 'scoped memory for tpu_custom_call.1']
    #allocation7 [shape = 'u8[262144]{0}', space=vmem, size = 0x40000, scoped, tag = 'output window, operand 0']
    #allocation8 [shape = 'u8[262144]{0}', space=vmem, size = 0x40000, scoped, tag = 'output window, operand 1']
    #allocation9 [shape = 's32[2]{0}', space=sflag, size = 0x8, scoped, tag = 'scoped memory for tpu_custom_call.1']
    %9 = vsyncpa [#allocation3], 0
    %s10 = scalar_lea.sflag [#allocation3], 1
    %11 = vsyncpa %s10, 0
    %12 = vsyncpa [#allocation6], 0
    %13 = vsyncpa [#allocation4], 0
    %s14 = scalar_lea.sflag [#allocation4], 1
    %15 = vsyncpa %s14, 0
    %16 = vsyncpa [#allocation9], 0
    %s17 = scalar_lea.sflag [#allocation9], 1
    %18 = vsyncpa %s17, 0
    loop: start=0, step=1, limit=6
    $region2: #{tpu_custom_call.1} parent=1 // loop_pre_header
      _
    $region3: #{tpu_custom_call.1} parent=1 // loop_header
      %s20 = sphi 0, %s24
      %p21 = scmp.ge.s32.totalorder %s20, 6
      %s27 = sphi 0, %s39
      %s28 = sphi 0, %s35
      %s29 = sphi 0, %s27
      %s30 = sphi 0, %s28
      %s31 = sphi 0, %s29
      %s32 = sphi 0, %s30
      %s44 = sphi 0, %s46
      %s47 = sphi 0, %s44
      %s48 = sphi 0, %s47
      %s64 = sphi 0, %s48
      %s68 = sphi 0, %s68
      %s70 = sphi 0, %s68
      %s71 = sphi 0, %s70
      %s85 = sphi 0, %s71
      %s93 = sphi 0, %s95
      %s96 = sphi 0, %s93
      %s97 = sphi 0, %s96
      %s113 = sphi 0, %s97
      %s121 = sphi 0, %s123
      %s124 = sphi 0, %s121
      %s125 = sphi 0, %s124
      %s141 = sphi 0, %s125
    $region4: #{tpu_custom_call.1} parent=1 // loop_header_branch
      %23 = sbr.rel (%p21) target = $region8
    $region5: #{tpu_custom_call.1} parent=1 // loop_body
      %s25 = ssub.s32 %s20, 1
      %s26 = ssub.s32 %s20, 2
      %s33 = sadd.s32 1, %s28
      %p34 = scmp.ge.s32.totalorder %s33, 2
      %s35 = scalar_select %p34, 0, %s33
      %s36 = sadd.s32 1, %s27
      %s37 = scalar_select %p34, %s36, %s27
      %p38 = scmp.ge.s32.totalorder %s37, 2
      %s39 = scalar_select %p38, 0, %s37
      %s40 = ssub.s32 %s27, %s39
      %s41 = ssub.s32 %s28, %s35
      %s42 = sor.u32 %s40, %s41
      %p43 = scmp.eq.s32.totalorder %s42, 0
      %s45 = sadd.s32 %s44, 1
      %s46 = scalar_select %p43, %s44, %s45
      %p49 = pneg %p43
      %p50 = scmp.eq.s32.totalorder %s20, 3
      %p51 = por %p49, %p50
      %p52 = scmp.ne.s32.totalorder %s44, %s47
      %p53 = scmp.eq.s32.totalorder %s20, 0
      %p54 = por %p52, %p53
      %p55 = scmp.ne.s32.totalorder %s44, %s47
      %p56 = scmp.eq.s32.totalorder %s25, 3
      %p57 = por %p55, %p56
      %p58 = scmp.ne.s32.totalorder %s47, %s48
      %p59 = scmp.eq.s32.totalorder %s25, 0
      %p60 = por %p58, %p59
      %p61 = scmp.ne.s32.totalorder %s47, %s48
      %p62 = scmp.eq.s32.totalorder %s26, 3
      %p63 = por %p61, %p62
      %p65 = scmp.ne.s32.totalorder %s48, %s64
      %p66 = scmp.eq.s32.totalorder %s26, 0
      %p67 = por %p65, %p66
      %s69 = sadd.s32 %s68, 1
      %p72 = scmp.eq.s32.totalorder %s20, 3
      %p73 = scmp.ne.s32.totalorder %s68, %s70
      %p74 = scmp.eq.s32.totalorder %s20, 0
      %p75 = por %p73, %p74
      %p76 = scmp.ne.s32.totalorder %s68, %s70
      %p77 = scmp.eq.s32.totalorder %s25, 3
      %p78 = por %p76, %p77
      %p79 = scmp.ne.s32.totalorder %s70, %s71
      %p80 = scmp.eq.s32.totalorder %s25, 0
      %p81 = por %p79, %p80
      %p82 = scmp.ne.s32.totalorder %s70, %s71
      %p83 = scmp.eq.s32.totalorder %s26, 3
      %p84 = por %p82, %p83
      %p86 = scmp.ne.s32.totalorder %s71, %s85
      %p87 = scmp.eq.s32.totalorder %s26, 0
      %p88 = por %p86, %p87
      %s89 = ssub.s32 %s27, %s39
      %s90 = ssub.s32 %s28, %s35
      %s91 = sor.u32 %s89, %s90
      %p92 = scmp.eq.s32.totalorder %s91, 0
      %s94 = sadd.s32 %s93, 1
      %s95 = scalar_select %p92, %s93, %s94
      %p98 = pneg %p92
      %p99 = scmp.eq.s32.totalorder %s20, 3
      %p100 = por %p98, %p99
      %p101 = scmp.ne.s32.totalorder %s93, %s96
      %p102 = scmp.eq.s32.totalorder %s20, 0
      %p103 = por %p101, %p102
      %p104 = scmp.ne.s32.totalorder %s93, %s96
      %p105 = scmp.eq.s32.totalorder %s25, 3
      %p106 = por %p104, %p105
      %p107 = scmp.ne.s32.totalorder %s96, %s97
      %p108 = scmp.eq.s32.totalorder %s25, 0
      %p109 = por %p107, %p108
      %p110 = scmp.ne.s32.totalorder %s96, %s97
      %p111 = scmp.eq.s32.totalorder %s26, 3
      %p112 = por %p110, %p111
      %p114 = scmp.ne.s32.totalorder %s97, %s113
      %p115 = scmp.eq.s32.totalorder %s26, 0
      %p116 = por %p114, %p115
      %s117 = ssub.s32 %s27, %s39
      %s118 = ssub.s32 %s28, %s35
      %s119 = sor.u32 %s117, %s118
      %p120 = scmp.eq.s32.totalorder %s119, 0
      %s122 = sadd.s32 %s121, 1
      %s123 = scalar_select %p120, %s121, %s122
      %p126 = pneg %p120
      %p127 = scmp.eq.s32.totalorder %s20, 3
      %p128 = por %p126, %p127
      %p129 = scmp.ne.s32.totalorder %s121, %s124
      %p130 = scmp.eq.s32.totalorder %s20, 0
      %p131 = por %p129, %p130
      %p132 = scmp.ne.s32.totalorder %s121, %s124
      %p133 = scmp.eq.s32.totalorder %s25, 3
      %p134 = por %p132, %p133
      %p135 = scmp.ne.s32.totalorder %s124, %s125
      %p136 = scmp.eq.s32.totalorder %s25, 0
      %p137 = por %p135, %p136
      %p138 = scmp.ne.s32.totalorder %s124, %s125
      %p139 = scmp.eq.s32.totalorder %s26, 3
      %p140 = por %p138, %p139
      %p142 = scmp.ne.s32.totalorder %s125, %s141
      %p143 = scmp.eq.s32.totalorder %s26, 0
      %p144 = por %p142, %p143
      %p145 = scmp.le.s32.totalorder 1, %s20
      %p146 = scmp.lt.s32.totalorder %s20, 5
      %p147 = pnand %p145, %p146
      %p148 = pneg %p147
      // Predicated region
      $region9: #{tpu_custom_call.1} parent=5 // pred_check
        _
      $region10: #{tpu_custom_call.1} parent=5 // pred_check_branch
        %150 = sbr.rel (%p147) target = $region12
      $region11: #{tpu_custom_call.1} parent=5 // pred_region
        %s151 = ssub.s32 %s20, 1
        // Predicated region
        $region13: #{tpu_custom_call.1} parent=11 // pred_check
          %p152 = pneg %p81
        $region14: #{tpu_custom_call.1} parent=11 // pred_check_branch
          %154 = sbr.rel (%p152) target = $region16
        $region15: #{tpu_custom_call.1} parent=11 // pred_region
          %156 = vsyncadd [#allocation6], 0
          %s157 = sshll.u32 %s1, 4
          %s158 = int_to_ptr.hbm [resolvable:$true] %s157
          %s159 = sshll.u32 [#allocation5], 4
          %s160 = int_to_ptr.vmem [resolvable:$true] %s159
          %165 = dma.hbm_to_vmem [thread:$0]  %s158, 8192, %s160, [#allocation6], 256, 256, 16
        $region16: #{tpu_custom_call.1} parent=11 // pred_fallthru
          _
      $region12: #{tpu_custom_call.1} parent=5 // pred_fallthru
        _
      %p166 = scmp.lt.s32.totalorder %s20, 4
      // Predicated region
      $region17: #{tpu_custom_call.1} parent=5 // pred_check
        %p167 = pneg %p166
      $region18: #{tpu_custom_call.1} parent=5 // pred_check_branch
        %169 = sbr.rel (%p167) target = $region20
      $region19: #{tpu_custom_call.1} parent=5 // pred_region
        // Predicated region
        $region21: #{tpu_custom_call.1} parent=19 // pred_check
          %p170 = pneg %p54
        $region22: #{tpu_custom_call.1} parent=19 // pred_check_branch
          %172 = sbr.rel (%p170) target = $region24
        $region23: #{tpu_custom_call.1} parent=19 // pred_region
          %s173 = sand.u32 %s44, 1
          %s174 = scalar_lea.sflag [#allocation3], %s173
          %s175 = sand.u32 %s44, 1
          %s176 = smul.addr %s175, 256
          %s177 = scalar_lea.vmem [#allocation2], %s176
          %s178 = smul.u32 32, %s28
          %180 = vsyncadd %s174, 0
          %s181 = smul.addr %s178, 2
          %s182 = smul.addr %s27, 128
          %s183 = sadd.s32 %s181, %s182
          %s184 = smul.addr %s183, 4
          %s185 = scalar_lea.hbm %s0, %s184
          %s186 = sshll.u32 %s185, 4
          %s187 = int_to_ptr.hbm [resolvable:$true] %s186
          %s188 = sshll.u32 %s177, 4
          %s189 = int_to_ptr.vmem [resolvable:$true] %s188
          %194 = dma.hbm_to_vmem [thread:$0]  %s187, 4096, %s189, %s174, 128, 128, 8
        $region24: #{tpu_custom_call.1} parent=19 // pred_fallthru
          _
      $region20: #{tpu_custom_call.1} parent=5 // pred_fallthru
        _
      %p195 = scmp.le.s32.totalorder 1, %s20
      %p196 = scmp.lt.s32.totalorder %s20, 5
      %p197 = pnand %p195, %p196
      %p198 = pneg %p197
      // Predicated region
      $region25: #{tpu_custom_call.1} parent=5 // pred_check
        _
      $region26: #{tpu_custom_call.1} parent=5 // pred_check_branch
        %200 = sbr.rel (%p197) target = $region28
      $region27: #{tpu_custom_call.1} parent=5 // pred_region
        %s201 = ssub.s32 %s20, 1
        %s202 = sand.u32 %s47, 1
        %s203 = scalar_lea.sflag [#allocation3], %s202
        %s204 = sand.u32 %s47, 1
        %s205 = smul.addr %s204, 256
        %s206 = scalar_lea.vmem [#allocation2], %s205
        // Predicated region
        $region29: #{tpu_custom_call.1} parent=27 // pred_check
          %p207 = pneg %p60
        $region30: #{tpu_custom_call.1} parent=27 // pred_check_branch
          %209 = sbr.rel (%p207) target = $region32
        $region31: #{tpu_custom_call.1} parent=27 // pred_region
          %211 = dma.done %s203, 4096
        $region32: #{tpu_custom_call.1} parent=27 // pred_fallthru
          _
        // Predicated region
        $region33: #{tpu_custom_call.1} parent=27 // pred_check
          %p212 = pneg %p81
        $region34: #{tpu_custom_call.1} parent=27 // pred_check_branch
          %214 = sbr.rel (%p212) target = $region36
        $region35: #{tpu_custom_call.1} parent=27 // pred_region
          %216 = dma.done [#allocation6], 8192
        $region36: #{tpu_custom_call.1} parent=27 // pred_fallthru
          _
        %s217 = sand.u32 %s47, 1
        %s218 = scalar_lea.sflag [#allocation3], %s217
        %s219 = sand.u32 %s47, 1
        %s220 = smul.addr %s219, 256
        %s221 = scalar_lea.vmem [#allocation2], %s220
        %p222 = pneg %p60
        %p223 = pneg %p57
        %p224 = pneg %p81
        %p225 = pneg %p78
        %p226 = pneg %p109
        %p227 = pneg %p106
        %s228 = sand.u32 %s96, 1
        %s229 = scalar_lea.sflag [#allocation4], %s228
        %s230 = sand.u32 %s96, 1
        %s231 = smul.addr %s230, 256
        %s232 = scalar_lea.vmem [#allocation7], %s231
        %p233 = pneg %p137
        %p234 = pneg %p134
        %s235 = sand.u32 %s124, 1
        %s236 = scalar_lea.sflag [#allocation9], %s235
        %s237 = sand.u32 %s124, 1
        %s238 = smul.addr %s237, 256
        %s239 = scalar_lea.vmem [#allocation8], %s238
        %s240 = smul.u32 32, %s30
        %s241 = smul.u32 32, %s30
        %s242 = smul.u32 32, %s30
        %v243 = vld [vmem:[%s206] sm:$0xff]
        %v244 = vld [vmem:[%s206 + $0x8] sm:$0xff]
        %v245 = vld [vmem:[%s206 + $0x10] sm:$0xff]
        %v246 = vld [vmem:[%s206 + $0x18] sm:$0xff]
        %v247 = vld [vmem:[%s206 + $0x20] sm:$0xff]
        %v248 = vld [vmem:[%s206 + $0x28] sm:$0xff]
        %v249 = vld [vmem:[%s206 + $0x30] sm:$0xff]
        %v250 = vld [vmem:[%s206 + $0x38] sm:$0xff]
        %v251 = vld [vmem:[%s206 + $0x40] sm:$0xff]
        %v252 = vld [vmem:[%s206 + $0x48] sm:$0xff]
        %v253 = vld [vmem:[%s206 + $0x50] sm:$0xff]
        %v254 = vld [vmem:[%s206 + $0x58] sm:$0xff]
        %v255 = vld [vmem:[%s206 + $0x60] sm:$0xff]
        %v256 = vld [vmem:[%s206 + $0x68] sm:$0xff]
        %v257 = vld [vmem:[%s206 + $0x70] sm:$0xff]
        %v258 = vld [vmem:[%s206 + $0x78] sm:$0xff]
        %v259 = vld [vmem:[%s206 + $0x80] sm:$0xff]
        %v260 = vld [vmem:[%s206 + $0x88] sm:$0xff]
        %v261 = vld [vmem:[%s206 + $0x90] sm:$0xff]
        %v262 = vld [vmem:[%s206 + $0x98] sm:$0xff]
        %v263 = vld [vmem:[%s206 + $0xa0] sm:$0xff]
        %v264 = vld [vmem:[%s206 + $0xa8] sm:$0xff]
        %v265 = vld [vmem:[%s206 + $0xb0] sm:$0xff]
        %v266 = vld [vmem:[%s206 + $0xb8] sm:$0xff]
        %v267 = vld [vmem:[%s206 + $0xc0] sm:$0xff]
        %v268 = vld [vmem:[%s206 + $0xc8] sm:$0xff]
        %v269 = vld [vmem:[%s206 + $0xd0] sm:$0xff]
        %v270 = vld [vmem:[%s206 + $0xd8] sm:$0xff]
        %v271 = vld [vmem:[%s206 + $0xe0] sm:$0xff]
        %v272 = vld [vmem:[%s206 + $0xe8] sm:$0xff]
        %v273 = vld [vmem:[%s206 + $0xf0] sm:$0xff]
        %v274 = vld [vmem:[%s206 + $0xf8] sm:$0xff]
        %v275 = vld [vmem:[#allocation5] sm:$0xff]
        %v276 = vld [vmem:[#allocation5 + $0x8] sm:$0xff]
        %v277 = vld [vmem:[#allocation5 + $0x10] sm:$0xff]
        %v278 = vld [vmem:[#allocation5 + $0x18] sm:$0xff]
        %v279 = vld [vmem:[#allocation5 + $0x20] sm:$0xff]
        %v280 = vld [vmem:[#allocation5 + $0x28] sm:$0xff]
        %v281 = vld [vmem:[#allocation5 + $0x30] sm:$0xff]
        %v282 = vld [vmem:[#allocation5 + $0x38] sm:$0xff]
        %v283 = vld [vmem:[#allocation5 + $0x40] sm:$0xff]
        %v284 = vld [vmem:[#allocation5 + $0x48] sm:$0xff]
        %v285 = vld [vmem:[#allocation5 + $0x50] sm:$0xff]
        %v286 = vld [vmem:[#allocation5 + $0x58] sm:$0xff]
        %v287 = vld [vmem:[#allocation5 + $0x60] sm:$0xff]
        %v288 = vld [vmem:[#allocation5 + $0x68] sm:$0xff]
        %v289 = vld [vmem:[#allocation5 + $0x70] sm:$0xff]
        %v290 = vld [vmem:[#allocation5 + $0x78] sm:$0xff]
        %v291 = vld [vmem:[#allocation5 + $0x80] sm:$0xff]
        %v292 = vld [vmem:[#allocation5 + $0x88] sm:$0xff]
        %v293 = vld [vmem:[#allocation5 + $0x90] sm:$0xff]
        %v294 = vld [vmem:[#allocation5 + $0x98] sm:$0xff]
        %v295 = vld [vmem:[#allocation5 + $0xa0] sm:$0xff]
        %v296 = vld [vmem:[#allocation5 + $0xa8] sm:$0xff]
        %v297 = vld [vmem:[#allocation5 + $0xb0] sm:$0xff]
        %v298 = vld [vmem:[#allocation5 + $0xb8] sm:$0xff]
        %v299 = vld [vmem:[#allocation5 + $0xc0] sm:$0xff]
        %v300 = vld [vmem:[#allocation5 + $0xc8] sm:$0xff]
        %v301 = vld [vmem:[#allocation5 + $0xd0] sm:$0xff]
        %v302 = vld [vmem:[#allocation5 + $0xd8] sm:$0xff]
        %v303 = vld [vmem:[#allocation5 + $0xe0] sm:$0xff]
        %v304 = vld [vmem:[#allocation5 + $0xe8] sm:$0xff]
        %v305 = vld [vmem:[#allocation5 + $0xf0] sm:$0xff]
        %v306 = vld [vmem:[#allocation5 + $0xf8] sm:$0xff]
        %v307 = vld [vmem:[#allocation5 + $0x100] sm:$0xff]
        %v308 = vld [vmem:[#allocation5 + $0x108] sm:$0xff]
        %v309 = vld [vmem:[#allocation5 + $0x110] sm:$0xff]
        %v310 = vld [vmem:[#allocation5 + $0x118] sm:$0xff]
        %v311 = vld [vmem:[#allocation5 + $0x120] sm:$0xff]
        %v312 = vld [vmem:[#allocation5 + $0x128] sm:$0xff]
        %v313 = vld [vmem:[#allocation5 + $0x130] sm:$0xff]
        %v314 = vld [vmem:[#allocation5 + $0x138] sm:$0xff]
        %v315 = vld [vmem:[#allocation5 + $0x140] sm:$0xff]
        %v316 = vld [vmem:[#allocation5 + $0x148] sm:$0xff]
        %v317 = vld [vmem:[#allocation5 + $0x150] sm:$0xff]
        %v318 = vld [vmem:[#allocation5 + $0x158] sm:$0xff]
        %v319 = vld [vmem:[#allocation5 + $0x160] sm:$0xff]
        %v320 = vld [vmem:[#allocation5 + $0x168] sm:$0xff]
        %v321 = vld [vmem:[#allocation5 + $0x170] sm:$0xff]
        %v322 = vld [vmem:[#allocation5 + $0x178] sm:$0xff]
        %v323 = vld [vmem:[#allocation5 + $0x180] sm:$0xff]
        %v324 = vld [vmem:[#allocation5 + $0x188] sm:$0xff]
        %v325 = vld [vmem:[#allocation5 + $0x190] sm:$0xff]
        %v326 = vld [vmem:[#allocation5 + $0x198] sm:$0xff]
        %v327 = vld [vmem:[#allocation5 + $0x1a0] sm:$0xff]
        %v328 = vld [vmem:[#allocation5 + $0x1a8] sm:$0xff]
        %v329 = vld [vmem:[#allocation5 + $0x1b0] sm:$0xff]
        %v330 = vld [vmem:[#allocation5 + $0x1b8] sm:$0xff]
        %v331 = vld [vmem:[#allocation5 + $0x1c0] sm:$0xff]
        %v332 = vld [vmem:[#allocation5 + $0x1c8] sm:$0xff]
        %v333 = vld [vmem:[#allocation5 + $0x1d0] sm:$0xff]
        %v334 = vld [vmem:[#allocation5 + $0x1d8] sm:$0xff]
        %v335 = vld [vmem:[#allocation5 + $0x1e0] sm:$0xff]
        %v336 = vld [vmem:[#allocation5 + $0x1e8] sm:$0xff]
        %v337 = vld [vmem:[#allocation5 + $0x1f0] sm:$0xff]
        %v338 = vld [vmem:[#allocation5 + $0x1f8] sm:$0xff]
        %v371 = vunpack.c.l.b16 %v243
        %v372 = vunpack.c.h.b16 %v243
        %v373 = vunpack.c.l.b16 %v244
        %v374 = vunpack.c.h.b16 %v244
        %v375 = vunpack.c.l.b16 %v245
        %v376 = vunpack.c.h.b16 %v245
        %v377 = vunpack.c.l.b16 %v246
        %v378 = vunpack.c.h.b16 %v246
        %v379 = vunpack.c.l.b16 %v247
        %v380 = vunpack.c.h.b16 %v247
        %v381 = vunpack.c.l.b16 %v248
        %v382 = vunpack.c.h.b16 %v248
        %v383 = vunpack.c.l.b16 %v249
        %v384 = vunpack.c.h.b16 %v249
        %v385 = vunpack.c.l.b16 %v250
        %v386 = vunpack.c.h.b16 %v250
        %v387 = vunpack.c.l.b16 %v251
        %v388 = vunpack.c.h.b16 %v251
        %v389 = vunpack.c.l.b16 %v252
        %v390 = vunpack.c.h.b16 %v252
        %v391 = vunpack.c.l.b16 %v253
        %v392 = vunpack.c.h.b16 %v253
        %v393 = vunpack.c.l.b16 %v254
        %v394 = vunpack.c.h.b16 %v254
        %v395 = vunpack.c.l.b16 %v255
        %v396 = vunpack.c.h.b16 %v255
        %v397 = vunpack.c.l.b16 %v256
        %v398 = vunpack.c.h.b16 %v256
        %v399 = vunpack.c.l.b16 %v257
        %v400 = vunpack.c.h.b16 %v257
        %v401 = vunpack.c.l.b16 %v258
        %v402 = vunpack.c.h.b16 %v258
        %v403 = vunpack.c.l.b16 %v259
        %v404 = vunpack.c.h.b16 %v259
        %v405 = vunpack.c.l.b16 %v260
        %v406 = vunpack.c.h.b16 %v260
        %v407 = vunpack.c.l.b16 %v261
        %v408 = vunpack.c.h.b16 %v261
        %v409 = vunpack.c.l.b16 %v262
        %v410 = vunpack.c.h.b16 %v262
        %v411 = vunpack.c.l.b16 %v263
        %v412 = vunpack.c.h.b16 %v263
        %v413 = vunpack.c.l.b16 %v264
        %v414 = vunpack.c.h.b16 %v264
        %v415 = vunpack.c.l.b16 %v265
        %v416 = vunpack.c.h.b16 %v265
        %v417 = vunpack.c.l.b16 %v266
        %v418 = vunpack.c.h.b16 %v266
        %v419 = vunpack.c.l.b16 %v267
        %v420 = vunpack.c.h.b16 %v267
        %v421 = vunpack.c.l.b16 %v268
        %v422 = vunpack.c.h.b16 %v268
        %v423 = vunpack.c.l.b16 %v269
        %v424 = vunpack.c.h.b16 %v269
        %v425 = vunpack.c.l.b16 %v270
        %v426 = vunpack.c.h.b16 %v270
        %v427 = vunpack.c.l.b16 %v271
        %v428 = vunpack.c.h.b16 %v271
        %v429 = vunpack.c.l.b16 %v272
        %v430 = vunpack.c.h.b16 %v272
        %v431 = vunpack.c.l.b16 %v273
        %v432 = vunpack.c.h.b16 %v273
        %v433 = vunpack.c.l.b16 %v274
        %v434 = vunpack.c.h.b16 %v274
        %v435 = vpack.c.b16 %v373, %v371
        %v436 = vpack.c.b16 %v374, %v372
        %v437 = vpack.c.b16 %v377, %v375
        %v438 = vpack.c.b16 %v378, %v376
        %v439 = vpack.c.b16 %v381, %v379
        %v440 = vpack.c.b16 %v382, %v380
        %v441 = vpack.c.b16 %v385, %v383
        %v442 = vpack.c.b16 %v386, %v384
        %v443 = vpack.c.b16 %v389, %v387
        %v444 = vpack.c.b16 %v390, %v388
        %v445 = vpack.c.b16 %v393, %v391
        %v446 = vpack.c.b16 %v394, %v392
        %v447 = vpack.c.b16 %v397, %v395
        %v448 = vpack.c.b16 %v398, %v396
        %v449 = vpack.c.b16 %v401, %v399
        %v450 = vpack.c.b16 %v402, %v400
        %v451 = vpack.c.b16 %v405, %v403
        %v452 = vpack.c.b16 %v406, %v404
        %v453 = vpack.c.b16 %v409, %v407
        %v454 = vpack.c.b16 %v410, %v408
        %v455 = vpack.c.b16 %v413, %v411
        %v456 = vpack.c.b16 %v414, %v412
        %v457 = vpack.c.b16 %v417, %v415
        %v458 = vpack.c.b16 %v418, %v416
        %v459 = vpack.c.b16 %v421, %v419
        %v460 = vpack.c.b16 %v422, %v420
        %v461 = vpack.c.b16 %v425, %v423
        %v462 = vpack.c.b16 %v426, %v424
        %v463 = vpack.c.b16 %v429, %v427
        %v464 = vpack.c.b16 %v430, %v428
        %v465 = vpack.c.b16 %v433, %v431
        %v466 = vpack.c.b16 %v434, %v432
        %v563 = vunpack.c.l.b16 %v275
        %v564 = vunpack.c.h.b16 %v275
        %v565 = vunpack.c.l.b16 %v276
        %v566 = vunpack.c.h.b16 %v276
        %v567 = vunpack.c.l.b16 %v277
        %v568 = vunpack.c.h.b16 %v277
        %v569 = vunpack.c.l.b16 %v278
        %v570 = vunpack.c.h.b16 %v278
        %v571 = vunpack.c.l.b16 %v279
        %v572 = vunpack.c.h.b16 %v279
        %v573 = vunpack.c.l.b16 %v280
        %v574 = vunpack.c.h.b16 %v280
        %v575 = vunpack.c.l.b16 %v281
        %v576 = vunpack.c.h.b16 %v281
        %v577 = vunpack.c.l.b16 %v282
        %v578 = vunpack.c.h.b16 %v282
        %v579 = vunpack.c.l.b16 %v283
        %v580 = vunpack.c.h.b16 %v283
        %v581 = vunpack.c.l.b16 %v284
        %v582 = vunpack.c.h.b16 %v284
        %v583 = vunpack.c.l.b16 %v285
        %v584 = vunpack.c.h.b16 %v285
        %v585 = vunpack.c.l.b16 %v286
        %v586 = vunpack.c.h.b16 %v286
        %v587 = vunpack.c.l.b16 %v287
        %v588 = vunpack.c.h.b16 %v287
        %v589 = vunpack.c.l.b16 %v288
        %v590 = vunpack.c.h.b16 %v288
        %v591 = vunpack.c.l.b16 %v289
        %v592 = vunpack.c.h.b16 %v289
        %v593 = vunpack.c.l.b16 %v290
        %v594 = vunpack.c.h.b16 %v290
        %v595 = vunpack.c.l.b16 %v291
        %v596 = vunpack.c.h.b16 %v291
        %v597 = vunpack.c.l.b16 %v292
        %v598 = vunpack.c.h.b16 %v292
        %v599 = vunpack.c.l.b16 %v293
        %v600 = vunpack.c.h.b16 %v293
        %v601 = vunpack.c.l.b16 %v294
        %v602 = vunpack.c.h.b16 %v294
        %v603 = vunpack.c.l.b16 %v295
        %v604 = vunpack.c.h.b16 %v295
        %v605 = vunpack.c.l.b16 %v296
        %v606 = vunpack.c.h.b16 %v296
        %v607 = vunpack.c.l.b16 %v297
        %v608 = vunpack.c.h.b16 %v297
        %v609 = vunpack.c.l.b16 %v298
        %v610 = vunpack.c.h.b16 %v298
        %v611 = vunpack.c.l.b16 %v299
        %v612 = vunpack.c.h.b16 %v299
        %v613 = vunpack.c.l.b16 %v300
        %v614 = vunpack.c.h.b16 %v300
        %v615 = vunpack.c.l.b16 %v301
        %v616 = vunpack.c.h.b16 %v301
        %v617 = vunpack.c.l.b16 %v302
        %v618 = vunpack.c.h.b16 %v302
        %v619 = vunpack.c.l.b16 %v303
        %v620 = vunpack.c.h.b16 %v303
        %v621 = vunpack.c.l.b16 %v304
        %v622 = vunpack.c.h.b16 %v304
        %v623 = vunpack.c.l.b16 %v305
        %v624 = vunpack.c.h.b16 %v305
        %v625 = vunpack.c.l.b16 %v306
        %v626 = vunpack.c.h.b16 %v306
        %v627 = vunpack.c.l.b16 %v307
        %v628 = vunpack.c.h.b16 %v307
        %v629 = vunpack.c.l.b16 %v308
        %v630 = vunpack.c.h.b16 %v308
        %v631 = vunpack.c.l.b16 %v309
        %v632 = vunpack.c.h.b16 %v309
        %v633 = vunpack.c.l.b16 %v310
        %v634 = vunpack.c.h.b16 %v310
        %v635 = vunpack.c.l.b16 %v311
        %v636 = vunpack.c.h.b16 %v311
        %v637 = vunpack.c.l.b16 %v312
        %v638 = vunpack.c.h.b16 %v312
        %v639 = vunpack.c.l.b16 %v313
        %v640 = vunpack.c.h.b16 %v313
        %v641 = vunpack.c.l.b16 %v314
        %v642 = vunpack.c.h.b16 %v314
        %v643 = vunpack.c.l.b16 %v315
        %v644 = vunpack.c.h.b16 %v315
        %v645 = vunpack.c.l.b16 %v316
        %v646 = vunpack.c.h.b16 %v316
        %v647 = vunpack.c.l.b16 %v317
        %v648 = vunpack.c.h.b16 %v317
        %v649 = vunpack.c.l.b16 %v318
        %v650 = vunpack.c.h.b16 %v318
        %v651 = vunpack.c.l.b16 %v319
        %v652 = vunpack.c.h.b16 %v319
        %v653 = vunpack.c.l.b16 %v320
        %v654 = vunpack.c.h.b16 %v320
        %v655 = vunpack.c.l.b16 %v321
        %v656 = vunpack.c.h.b16 %v321
        %v657 = vunpack.c.l.b16 %v322
        %v658 = vunpack.c.h.b16 %v322
        %v659 = vunpack.c.l.b16 %v323
        %v660 = vunpack.c.h.b16 %v323
        %v661 = vunpack.c.l.b16 %v324
        %v662 = vunpack.c.h.b16 %v324
        %v663 = vunpack.c.l.b16 %v325
        %v664 = vunpack.c.h.b16 %v325
        %v665 = vunpack.c.l.b16 %v326
        %v666 = vunpack.c.h.b16 %v326
        %v667 = vunpack.c.l.b16 %v327
        %v668 = vunpack.c.h.b16 %v327
        %v669 = vunpack.c.l.b16 %v328
        %v670 = vunpack.c.h.b16 %v328
        %v671 = vunpack.c.l.b16 %v329
        %v672 = vunpack.c.h.b16 %v329
        %v673 = vunpack.c.l.b16 %v330
        %v674 = vunpack.c.h.b16 %v330
        %v675 = vunpack.c.l.b16 %v331
        %v676 = vunpack.c.h.b16 %v331
        %v677 = vunpack.c.l.b16 %v332
        %v678 = vunpack.c.h.b16 %v332
        %v679 = vunpack.c.l.b16 %v333
        %v680 = vunpack.c.h.b16 %v333
        %v681 = vunpack.c.l.b16 %v334
        %v682 = vunpack.c.h.b16 %v334
        %v683 = vunpack.c.l.b16 %v335
        %v684 = vunpack.c.h.b16 %v335
        %v685 = vunpack.c.l.b16 %v336
        %v686 = vunpack.c.h.b16 %v336
        %v687 = vunpack.c.l.b16 %v337
        %v688 = vunpack.c.h.b16 %v337
        %v689 = vunpack.c.l.b16 %v338
        %v690 = vunpack.c.h.b16 %v338
        %v691 = vpack.c.b16 %v567, %v563
        %v692 = vpack.c.b16 %v568, %v564
        %v693 = vpack.c.b16 %v569, %v565
        %v694 = vpack.c.b16 %v570, %v566
        %v695 = vpack.c.b16 %v575, %v571
        %v696 = vpack.c.b16 %v576, %v572
        %v697 = vpack.c.b16 %v577, %v573
        %v698 = vpack.c.b16 %v578, %v574
        %v699 = vpack.c.b16 %v583, %v579
        %v700 = vpack.c.b16 %v584, %v580
        %v701 = vpack.c.b16 %v585, %v581
        %v702 = vpack.c.b16 %v586, %v582
        %v703 = vpack.c.b16 %v591, %v587
        %v704 = vpack.c.b16 %v592, %v588
        %v705 = vpack.c.b16 %v593, %v589
        %v706 = vpack.c.b16 %v594, %v590
        %v707 = vpack.c.b16 %v599, %v595
        %v708 = vpack.c.b16 %v600, %v596
        %v709 = vpack.c.b16 %v601, %v597
        %v710 = vpack.c.b16 %v602, %v598
        %v711 = vpack.c.b16 %v607, %v603
        %v712 = vpack.c.b16 %v608, %v604
        %v713 = vpack.c.b16 %v609, %v605
        %v714 = vpack.c.b16 %v610, %v606
        %v715 = vpack.c.b16 %v615, %v611
        %v716 = vpack.c.b16 %v616, %v612
        %v717 = vpack.c.b16 %v617, %v613
        %v718 = vpack.c.b16 %v618, %v614
        %v719 = vpack.c.b16 %v623, %v619
        %v720 = vpack.c.b16 %v624, %v620
        %v721 = vpack.c.b16 %v625, %v621
        %v722 = vpack.c.b16 %v626, %v622
        %v723 = vpack.c.b16 %v631, %v627
        %v724 = vpack.c.b16 %v632, %v628
        %v725 = vpack.c.b16 %v633, %v629
        %v726 = vpack.c.b16 %v634, %v630
        %v727 = vpack.c.b16 %v639, %v635
        %v728 = vpack.c.b16 %v640, %v636
        %v729 = vpack.c.b16 %v641, %v637
        %v730 = vpack.c.b16 %v642, %v638
        %v731 = vpack.c.b16 %v647, %v643
        %v732 = vpack.c.b16 %v648, %v644
        %v733 = vpack.c.b16 %v649, %v645
        %v734 = vpack.c.b16 %v650, %v646
        %v735 = vpack.c.b16 %v655, %v651
        %v736 = vpack.c.b16 %v656, %v652
        %v737 = vpack.c.b16 %v657, %v653
        %v738 = vpack.c.b16 %v658, %v654
        %v739 = vpack.c.b16 %v663, %v659
        %v740 = vpack.c.b16 %v664, %v660
        %v741 = vpack.c.b16 %v665, %v661
        %v742 = vpack.c.b16 %v666, %v662
        %v743 = vpack.c.b16 %v671, %v667
        %v744 = vpack.c.b16 %v672, %v668
        %v745 = vpack.c.b16 %v673, %v669
        %v746 = vpack.c.b16 %v674, %v670
        %v747 = vpack.c.b16 %v679, %v675
        %v748 = vpack.c.b16 %v680, %v676
        %v749 = vpack.c.b16 %v681, %v677
        %v750 = vpack.c.b16 %v682, %v678
        %v751 = vpack.c.b16 %v687, %v683
        %v752 = vpack.c.b16 %v688, %v684
        %v753 = vpack.c.b16 %v689, %v685
        %v754 = vpack.c.b16 %v690, %v686
        %819 = vmatpush.bf16.msra.mxu0 %v719
        %820 = vmatpush.bf16.msra.mxu0 %v715
        %821 = vmatpush.bf16.msra.mxu0 %v711
        %822 = vmatpush.bf16.msra.mxu0 %v707
        %823 = vmatpush.bf16.msra.mxu0 %v703
        %824 = vmatpush.bf16.msra.mxu0 %v699
        %825 = vmatpush.bf16.msra.mxu0 %v695
        %826 = vmatpush.bf16.msra.mxu0 %v691
        %827 = vmatmul.bf16.gmra.mxu0 %v435
        %v828 = vpop.f32.mrf.mxu0
        %v829 = vadd.f32 0.0, %v828
        %v830 = vpop.f32.mrf.mxu0
        %v831 = vadd.f32 0.0, %v830
        %832 = vmatmul.bf16.gmra.mxu0 %v437
        %v833 = vpop.f32.mrf.mxu0
        %v834 = vadd.f32 0.0, %v833
        %v835 = vpop.f32.mrf.mxu0
        %v836 = vadd.f32 0.0, %v835
        %837 = vmatmul.bf16.gmra.mxu0 %v439
        %v838 = vpop.f32.mrf.mxu0
        %v839 = vadd.f32 0.0, %v838
        %v840 = vpop.f32.mrf.mxu0
        %v841 = vadd.f32 0.0, %v840
        %842 = vmatmul.bf16.gmra.mxu0 %v441
        %v843 = vpop.f32.mrf.mxu0
        %v844 = vadd.f32 0.0, %v843
        %v845 = vpop.f32.mrf.mxu0
        %v846 = vadd.f32 0.0, %v845
        %847 = vmatmul.bf16.gmra.mxu0 %v443
        %v848 = vpop.f32.mrf.mxu0
        %v849 = vadd.f32 0.0, %v848
        %v850 = vpop.f32.mrf.mxu0
        %v851 = vadd.f32 0.0, %v850
        %852 = vmatmul.bf16.gmra.mxu0 %v445
        %v853 = vpop.f32.mrf.mxu0
        %v854 = vadd.f32 0.0, %v853
        %v855 = vpop.f32.mrf.mxu0
        %v856 = vadd.f32 0.0, %v855
        %857 = vmatmul.bf16.gmra.mxu0 %v447
        %v858 = vpop.f32.mrf.mxu0
        %v859 = vadd.f32 0.0, %v858
        %v860 = vpop.f32.mrf.mxu0
        %v861 = vadd.f32 0.0, %v860
        %862 = vmatmul.bf16.gmra.mxu0 %v449
        %v863 = vpop.f32.mrf.mxu0
        %v864 = vadd.f32 0.0, %v863
        %v865 = vpop.f32.mrf.mxu0
        %v866 = vadd.f32 0.0, %v865
        %867 = vmatmul.bf16.gmra.mxu0 %v451
        %v868 = vpop.f32.mrf.mxu0
        %v869 = vadd.f32 0.0, %v868
        %v870 = vpop.f32.mrf.mxu0
        %v871 = vadd.f32 0.0, %v870
        %872 = vmatmul.bf16.gmra.mxu0 %v453
        %v873 = vpop.f32.mrf.mxu0
        %v874 = vadd.f32 0.0, %v873
        %v875 = vpop.f32.mrf.mxu0
        %v876 = vadd.f32 0.0, %v875
        %877 = vmatmul.bf16.gmra.mxu0 %v455
        %v878 = vpop.f32.mrf.mxu0
        %v879 = vadd.f32 0.0, %v878
        %v880 = vpop.f32.mrf.mxu0
        %v881 = vadd.f32 0.0, %v880
        %882 = vmatmul.bf16.gmra.mxu0 %v457
        %v883 = vpop.f32.mrf.mxu0
        %v884 = vadd.f32 0.0, %v883
        %v885 = vpop.f32.mrf.mxu0
        %v886 = vadd.f32 0.0, %v885
        %887 = vmatmul.bf16.gmra.mxu0 %v459
        %v888 = vpop.f32.mrf.mxu0
        %v889 = vadd.f32 0.0, %v888
        %v890 = vpop.f32.mrf.mxu0
        %v891 = vadd.f32 0.0, %v890
        %892 = vmatmul.bf16.gmra.mxu0 %v461
        %v893 = vpop.f32.mrf.mxu0
        %v894 = vadd.f32 0.0, %v893
        %v895 = vpop.f32.mrf.mxu0
        %v896 = vadd.f32 0.0, %v895
        %897 = vmatmul.bf16.gmra.mxu0 %v463
        %v898 = vpop.f32.mrf.mxu0
        %v899 = vadd.f32 0.0, %v898
        %v900 = vpop.f32.mrf.mxu0
        %v901 = vadd.f32 0.0, %v900
        %902 = vmatmul.bf16.gmra.mxu0 %v465
        %v903 = vpop.f32.mrf.mxu0
        %v904 = vadd.f32 0.0, %v903
        %v905 = vpop.f32.mrf.mxu0
        %v906 = vadd.f32 0.0, %v905
        %907 = vdwg.mxu0
        %908 = vmatpush.bf16.msra.mxu0 %v751
        %909 = vmatpush.bf16.msra.mxu0 %v747
        %910 = vmatpush.bf16.msra.mxu0 %v743
        %911 = vmatpush.bf16.msra.mxu0 %v739
        %912 = vmatpush.bf16.msra.mxu0 %v735
        %913 = vmatpush.bf16.msra.mxu0 %v731
        %914 = vmatpush.bf16.msra.mxu0 %v727
        %915 = vmatpush.bf16.msra.mxu0 %v723
        %916 = vmatmul.bf16.gmra.mxu0 %v436
        %v917 = vpop.f32.mrf.mxu0
        %v918 = vadd.f32 %v829, %v917
        %v919 = vpop.f32.mrf.mxu0
        %v920 = vadd.f32 %v831, %v919
        %921 = vmatmul.bf16.gmra.mxu0 %v438
        %v922 = vpop.f32.mrf.mxu0
        %v923 = vadd.f32 %v834, %v922
        %v924 = vpop.f32.mrf.mxu0
        %v925 = vadd.f32 %v836, %v924
        %926 = vmatmul.bf16.gmra.mxu0 %v440
        %v927 = vpop.f32.mrf.mxu0
        %v928 = vadd.f32 %v839, %v927
        %v929 = vpop.f32.mrf.mxu0
        %v930 = vadd.f32 %v841, %v929
        %931 = vmatmul.bf16.gmra.mxu0 %v442
        %v932 = vpop.f32.mrf.mxu0
        %v933 = vadd.f32 %v844, %v932
        %v934 = vpop.f32.mrf.mxu0
        %v935 = vadd.f32 %v846, %v934
        %936 = vmatmul.bf16.gmra.mxu0 %v444
        %v937 = vpop.f32.mrf.mxu0
        %v938 = vadd.f32 %v849, %v937
        %v939 = vpop.f32.mrf.mxu0
        %v940 = vadd.f32 %v851, %v939
        %941 = vmatmul.bf16.gmra.mxu0 %v446
        %v942 = vpop.f32.mrf.mxu0
        %v943 = vadd.f32 %v854, %v942
        %v944 = vpop.f32.mrf.mxu0
        %v945 = vadd.f32 %v856, %v944
        %946 = vmatmul.bf16.gmra.mxu0 %v448
        %v947 = vpop.f32.mrf.mxu0
        %v948 = vadd.f32 %v859, %v947
        %v949 = vpop.f32.mrf.mxu0
        %v950 = vadd.f32 %v861, %v949
        %951 = vmatmul.bf16.gmra.mxu0 %v450
        %v952 = vpop.f32.mrf.mxu0
        %v953 = vadd.f32 %v864, %v952
        %v954 = vpop.f32.mrf.mxu0
        %v955 = vadd.f32 %v866, %v954
        %956 = vmatmul.bf16.gmra.mxu0 %v452
        %v957 = vpop.f32.mrf.mxu0
        %v958 = vadd.f32 %v869, %v957
        %v959 = vpop.f32.mrf.mxu0
        %v960 = vadd.f32 %v871, %v959
        %961 = vmatmul.bf16.gmra.mxu0 %v454
        %v962 = vpop.f32.mrf.mxu0
        %v963 = vadd.f32 %v874, %v962
        %v964 = vpop.f32.mrf.mxu0
        %v965 = vadd.f32 %v876, %v964
        %966 = vmatmul.bf16.gmra.mxu0 %v456
        %v967 = vpop.f32.mrf.mxu0
        %v968 = vadd.f32 %v879, %v967
        %v969 = vpop.f32.mrf.mxu0
        %v970 = vadd.f32 %v881, %v969
        %971 = vmatmul.bf16.gmra.mxu0 %v458
        %v972 = vpop.f32.mrf.mxu0
        %v973 = vadd.f32 %v884, %v972
        %v974 = vpop.f32.mrf.mxu0
        %v975 = vadd.f32 %v886, %v974
        %976 = vmatmul.bf16.gmra.mxu0 %v460
        %v977 = vpop.f32.mrf.mxu0
        %v978 = vadd.f32 %v889, %v977
        %v979 = vpop.f32.mrf.mxu0
        %v980 = vadd.f32 %v891, %v979
        %981 = vmatmul.bf16.gmra.mxu0 %v462
        %v982 = vpop.f32.mrf.mxu0
        %v983 = vadd.f32 %v894, %v982
        %v984 = vpop.f32.mrf.mxu0
        %v985 = vadd.f32 %v896, %v984
        %986 = vmatmul.bf16.gmra.mxu0 %v464
        %v987 = vpop.f32.mrf.mxu0
        %v988 = vadd.f32 %v899, %v987
        %v989 = vpop.f32.mrf.mxu0
        %v990 = vadd.f32 %v901, %v989
        %991 = vmatmul.bf16.gmra.mxu0 %v466
        %v992 = vpop.f32.mrf.mxu0
        %v993 = vadd.f32 %v904, %v992
        %v994 = vpop.f32.mrf.mxu0
        %v995 = vadd.f32 %v906, %v994
        %996 = vdwg.mxu0
        %997 = vmatpush.bf16.msra.mxu0 %v720
        %998 = vmatpush.bf16.msra.mxu0 %v716
        %999 = vmatpush.bf16.msra.mxu0 %v712
        %1000 = vmatpush.bf16.msra.mxu0 %v708
        %1001 = vmatpush.bf16.msra.mxu0 %v704
        %1002 = vmatpush.bf16.msra.mxu0 %v700
        %1003 = vmatpush.bf16.msra.mxu0 %v696
        %1004 = vmatpush.bf16.msra.mxu0 %v692
        %1005 = vmatmul.bf16.gmra.mxu0 %v435
        %v1006 = vpop.f32.mrf.mxu0
        %v1007 = vadd.f32 0.0, %v1006
        %v1008 = vpop.f32.mrf.mxu0
        %v1009 = vadd.f32 0.0, %v1008
        %1010 = vmatmul.bf16.gmra.mxu0 %v437
        %v1011 = vpop.f32.mrf.mxu0
        %v1012 = vadd.f32 0.0, %v1011
        %v1013 = vpop.f32.mrf.mxu0
        %v1014 = vadd.f32 0.0, %v1013
        %1015 = vmatmul.bf16.gmra.mxu0 %v439
        %v1016 = vpop.f32.mrf.mxu0
        %v1017 = vadd.f32 0.0, %v1016
        %v1018 = vpop.f32.mrf.mxu0
        %v1019 = vadd.f32 0.0, %v1018
        %1020 = vmatmul.bf16.gmra.mxu0 %v441
        %v1021 = vpop.f32.mrf.mxu0
        %v1022 = vadd.f32 0.0, %v1021
        %v1023 = vpop.f32.mrf.mxu0
        %v1024 = vadd.f32 0.0, %v1023
        %1025 = vmatmul.bf16.gmra.mxu0 %v443
        %v1026 = vpop.f32.mrf.mxu0
        %v1027 = vadd.f32 0.0, %v1026
        %v1028 = vpop.f32.mrf.mxu0
        %v1029 = vadd.f32 0.0, %v1028
        %1030 = vmatmul.bf16.gmra.mxu0 %v445
        %v1031 = vpop.f32.mrf.mxu0
        %v1032 = vadd.f32 0.0, %v1031
        %v1033 = vpop.f32.mrf.mxu0
        %v1034 = vadd.f32 0.0, %v1033
        %1035 = vmatmul.bf16.gmra.mxu0 %v447
        %v1036 = vpop.f32.mrf.mxu0
        %v1037 = vadd.f32 0.0, %v1036
        %v1038 = vpop.f32.mrf.mxu0
        %v1039 = vadd.f32 0.0, %v1038
        %1040 = vmatmul.bf16.gmra.mxu0 %v449
        %v1041 = vpop.f32.mrf.mxu0
        %v1042 = vadd.f32 0.0, %v1041
        %v1043 = vpop.f32.mrf.mxu0
        %v1044 = vadd.f32 0.0, %v1043
        %1045 = vmatmul.bf16.gmra.mxu0 %v451
        %v1046 = vpop.f32.mrf.mxu0
        %v1047 = vadd.f32 0.0, %v1046
        %v1048 = vpop.f32.mrf.mxu0
        %v1049 = vadd.f32 0.0, %v1048
        %1050 = vmatmul.bf16.gmra.mxu0 %v453
        %v1051 = vpop.f32.mrf.mxu0
        %v1052 = vadd.f32 0.0, %v1051
        %v1053 = vpop.f32.mrf.mxu0
        %v1054 = vadd.f32 0.0, %v1053
        %1055 = vmatmul.bf16.gmra.mxu0 %v455
        %v1056 = vpop.f32.mrf.mxu0
        %v1057 = vadd.f32 0.0, %v1056
        %v1058 = vpop.f32.mrf.mxu0
        %v1059 = vadd.f32 0.0, %v1058
        %1060 = vmatmul.bf16.gmra.mxu0 %v457
        %v1061 = vpop.f32.mrf.mxu0
        %v1062 = vadd.f32 0.0, %v1061
        %v1063 = vpop.f32.mrf.mxu0
        %v1064 = vadd.f32 0.0, %v1063
        %1065 = vmatmul.bf16.gmra.mxu0 %v459
        %v1066 = vpop.f32.mrf.mxu0
        %v1067 = vadd.f32 0.0, %v1066
        %v1068 = vpop.f32.mrf.mxu0
        %v1069 = vadd.f32 0.0, %v1068
        %1070 = vmatmul.bf16.gmra.mxu0 %v461
        %v1071 = vpop.f32.mrf.mxu0
        %v1072 = vadd.f32 0.0, %v1071
        %v1073 = vpop.f32.mrf.mxu0
        %v1074 = vadd.f32 0.0, %v1073
        %1075 = vmatmul.bf16.gmra.mxu0 %v463
        %v1076 = vpop.f32.mrf.mxu0
        %v1077 = vadd.f32 0.0, %v1076
        %v1078 = vpop.f32.mrf.mxu0
        %v1079 = vadd.f32 0.0, %v1078
        %1080 = vmatmul.bf16.gmra.mxu0 %v465
        %v1081 = vpop.f32.mrf.mxu0
        %v1082 = vadd.f32 0.0, %v1081
        %v1083 = vpop.f32.mrf.mxu0
        %v1084 = vadd.f32 0.0, %v1083
        %1085 = vdwg.mxu0
        %1086 = vmatpush.bf16.msra.mxu0 %v752
        %1087 = vmatpush.bf16.msra.mxu0 %v748
        %1088 = vmatpush.bf16.msra.mxu0 %v744
        %1089 = vmatpush.bf16.msra.mxu0 %v740
        %1090 = vmatpush.bf16.msra.mxu0 %v736
        %1091 = vmatpush.bf16.msra.mxu0 %v732
        %1092 = vmatpush.bf16.msra.mxu0 %v728
        %1093 = vmatpush.bf16.msra.mxu0 %v724
        %1094 = vmatmul.bf16.gmra.mxu0 %v436
        %v1095 = vpop.f32.mrf.mxu0
        %v1096 = vadd.f32 %v1007, %v1095
        %v1097 = vpop.f32.mrf.mxu0
        %v1098 = vadd.f32 %v1009, %v1097
        %1099 = vmatmul.bf16.gmra.mxu0 %v438
        %v1100 = vpop.f32.mrf.mxu0
        %v1101 = vadd.f32 %v1012, %v1100
        %v1102 = vpop.f32.mrf.mxu0
        %v1103 = vadd.f32 %v1014, %v1102
        %1104 = vmatmul.bf16.gmra.mxu0 %v440
        %v1105 = vpop.f32.mrf.mxu0
        %v1106 = vadd.f32 %v1017, %v1105
        %v1107 = vpop.f32.mrf.mxu0
        %v1108 = vadd.f32 %v1019, %v1107
        %1109 = vmatmul.bf16.gmra.mxu0 %v442
        %v1110 = vpop.f32.mrf.mxu0
        %v1111 = vadd.f32 %v1022, %v1110
        %v1112 = vpop.f32.mrf.mxu0
        %v1113 = vadd.f32 %v1024, %v1112
        %1114 = vmatmul.bf16.gmra.mxu0 %v444
        %v1115 = vpop.f32.mrf.mxu0
        %v1116 = vadd.f32 %v1027, %v1115
        %v1117 = vpop.f32.mrf.mxu0
        %v1118 = vadd.f32 %v1029, %v1117
        %1119 = vmatmul.bf16.gmra.mxu0 %v446
        %v1120 = vpop.f32.mrf.mxu0
        %v1121 = vadd.f32 %v1032, %v1120
        %v1122 = vpop.f32.mrf.mxu0
        %v1123 = vadd.f32 %v1034, %v1122
        %1124 = vmatmul.bf16.gmra.mxu0 %v448
        %v1125 = vpop.f32.mrf.mxu0
        %v1126 = vadd.f32 %v1037, %v1125
        %v1127 = vpop.f32.mrf.mxu0
        %v1128 = vadd.f32 %v1039, %v1127
        %1129 = vmatmul.bf16.gmra.mxu0 %v450
        %v1130 = vpop.f32.mrf.mxu0
        %v1131 = vadd.f32 %v1042, %v1130
        %v1132 = vpop.f32.mrf.mxu0
        %v1133 = vadd.f32 %v1044, %v1132
        %1134 = vmatmul.bf16.gmra.mxu0 %v452
        %v1135 = vpop.f32.mrf.mxu0
        %v1136 = vadd.f32 %v1047, %v1135
        %v1137 = vpop.f32.mrf.mxu0
        %v1138 = vadd.f32 %v1049, %v1137
        %1139 = vmatmul.bf16.gmra.mxu0 %v454
        %v1140 = vpop.f32.mrf.mxu0
        %v1141 = vadd.f32 %v1052, %v1140
        %v1142 = vpop.f32.mrf.mxu0
        %v1143 = vadd.f32 %v1054, %v1142
        %1144 = vmatmul.bf16.gmra.mxu0 %v456
        %v1145 = vpop.f32.mrf.mxu0
        %v1146 = vadd.f32 %v1057, %v1145
        %v1147 = vpop.f32.mrf.mxu0
        %v1148 = vadd.f32 %v1059, %v1147
        %1149 = vmatmul.bf16.gmra.mxu0 %v458
        %v1150 = vpop.f32.mrf.mxu0
        %v1151 = vadd.f32 %v1062, %v1150
        %v1152 = vpop.f32.mrf.mxu0
        %v1153 = vadd.f32 %v1064, %v1152
        %1154 = vmatmul.bf16.gmra.mxu0 %v460
        %v1155 = vpop.f32.mrf.mxu0
        %v1156 = vadd.f32 %v1067, %v1155
        %v1157 = vpop.f32.mrf.mxu0
        %v1158 = vadd.f32 %v1069, %v1157
        %1159 = vmatmul.bf16.gmra.mxu0 %v462
        %v1160 = vpop.f32.mrf.mxu0
        %v1161 = vadd.f32 %v1072, %v1160
        %v1162 = vpop.f32.mrf.mxu0
        %v1163 = vadd.f32 %v1074, %v1162
        %1164 = vmatmul.bf16.gmra.mxu0 %v464
        %v1165 = vpop.f32.mrf.mxu0
        %v1166 = vadd.f32 %v1077, %v1165
        %v1167 = vpop.f32.mrf.mxu0
        %v1168 = vadd.f32 %v1079, %v1167
        %1169 = vmatmul.bf16.gmra.mxu0 %v466
        %v1170 = vpop.f32.mrf.mxu0
        %v1171 = vadd.f32 %v1082, %v1170
        %v1172 = vpop.f32.mrf.mxu0
        %v1173 = vadd.f32 %v1084, %v1172
        %1174 = vdwg.mxu0
        %1175 = vmatpush.bf16.msra.mxu0 %v721
        %1176 = vmatpush.bf16.msra.mxu0 %v717
        %1177 = vmatpush.bf16.msra.mxu0 %v713
        %1178 = vmatpush.bf16.msra.mxu0 %v709
        %1179 = vmatpush.bf16.msra.mxu0 %v705
        %1180 = vmatpush.bf16.msra.mxu0 %v701
        %1181 = vmatpush.bf16.msra.mxu0 %v697
        %1182 = vmatpush.bf16.msra.mxu0 %v693
        %1183 = vmatmul.bf16.gmra.mxu0 %v435
        %v1184 = vpop.f32.mrf.mxu0
        %v1185 = vadd.f32 0.0, %v1184
        %v1186 = vpop.f32.mrf.mxu0
        %v1187 = vadd.f32 0.0, %v1186
        %1188 = vmatmul.bf16.gmra.mxu0 %v437
        %v1189 = vpop.f32.mrf.mxu0
        %v1190 = vadd.f32 0.0, %v1189
        %v1191 = vpop.f32.mrf.mxu0
        %v1192 = vadd.f32 0.0, %v1191
        %1193 = vmatmul.bf16.gmra.mxu0 %v439
        %v1194 = vpop.f32.mrf.mxu0
        %v1195 = vadd.f32 0.0, %v1194
        %v1196 = vpop.f32.mrf.mxu0
        %v1197 = vadd.f32 0.0, %v1196
        %1198 = vmatmul.bf16.gmra.mxu0 %v441
        %v1199 = vpop.f32.mrf.mxu0
        %v1200 = vadd.f32 0.0, %v1199
        %v1201 = vpop.f32.mrf.mxu0
        %v1202 = vadd.f32 0.0, %v1201
        %1203 = vmatmul.bf16.gmra.mxu0 %v443
        %v1204 = vpop.f32.mrf.mxu0
        %v1205 = vadd.f32 0.0, %v1204
        %v1206 = vpop.f32.mrf.mxu0
        %v1207 = vadd.f32 0.0, %v1206
        %1208 = vmatmul.bf16.gmra.mxu0 %v445
        %v1209 = vpop.f32.mrf.mxu0
        %v1210 = vadd.f32 0.0, %v1209
        %v1211 = vpop.f32.mrf.mxu0
        %v1212 = vadd.f32 0.0, %v1211
        %1213 = vmatmul.bf16.gmra.mxu0 %v447
        %v1214 = vpop.f32.mrf.mxu0
        %v1215 = vadd.f32 0.0, %v1214
        %v1216 = vpop.f32.mrf.mxu0
        %v1217 = vadd.f32 0.0, %v1216
        %1218 = vmatmul.bf16.gmra.mxu0 %v449
        %v1219 = vpop.f32.mrf.mxu0
        %v1220 = vadd.f32 0.0, %v1219
        %v1221 = vpop.f32.mrf.mxu0
        %v1222 = vadd.f32 0.0, %v1221
        %1223 = vmatmul.bf16.gmra.mxu0 %v451
        %v1224 = vpop.f32.mrf.mxu0
        %v1225 = vadd.f32 0.0, %v1224
        %v1226 = vpop.f32.mrf.mxu0
        %v1227 = vadd.f32 0.0, %v1226
        %1228 = vmatmul.bf16.gmra.mxu0 %v453
        %v1229 = vpop.f32.mrf.mxu0
        %v1230 = vadd.f32 0.0, %v1229
        %v1231 = vpop.f32.mrf.mxu0
        %v1232 = vadd.f32 0.0, %v1231
        %1233 = vmatmul.bf16.gmra.mxu0 %v455
        %v1234 = vpop.f32.mrf.mxu0
        %v1235 = vadd.f32 0.0, %v1234
        %v1236 = vpop.f32.mrf.mxu0
        %v1237 = vadd.f32 0.0, %v1236
        %1238 = vmatmul.bf16.gmra.mxu0 %v457
        %v1239 = vpop.f32.mrf.mxu0
        %v1240 = vadd.f32 0.0, %v1239
        %v1241 = vpop.f32.mrf.mxu0
        %v1242 = vadd.f32 0.0, %v1241
        %1243 = vmatmul.bf16.gmra.mxu0 %v459
        %v1244 = vpop.f32.mrf.mxu0
        %v1245 = vadd.f32 0.0, %v1244
        %v1246 = vpop.f32.mrf.mxu0
        %v1247 = vadd.f32 0.0, %v1246
        %1248 = vmatmul.bf16.gmra.mxu0 %v461
        %v1249 = vpop.f32.mrf.mxu0
        %v1250 = vadd.f32 0.0, %v1249
        %v1251 = vpop.f32.mrf.mxu0
        %v1252 = vadd.f32 0.0, %v1251
        %1253 = vmatmul.bf16.gmra.mxu0 %v463
        %v1254 = vpop.f32.mrf.mxu0
        %v1255 = vadd.f32 0.0, %v1254
        %v1256 = vpop.f32.mrf.mxu0
        %v1257 = vadd.f32 0.0, %v1256
        %1258 = vmatmul.bf16.gmra.mxu0 %v465
        %v1259 = vpop.f32.mrf.mxu0
        %v1260 = vadd.f32 0.0, %v1259
        %v1261 = vpop.f32.mrf.mxu0
        %v1262 = vadd.f32 0.0, %v1261
        %1263 = vdwg.mxu0
        %1264 = vmatpush.bf16.msra.mxu0 %v753
        %1265 = vmatpush.bf16.msra.mxu0 %v749
        %1266 = vmatpush.bf16.msra.mxu0 %v745
        %1267 = vmatpush.bf16.msra.mxu0 %v741
        %1268 = vmatpush.bf16.msra.mxu0 %v737
        %1269 = vmatpush.bf16.msra.mxu0 %v733
        %1270 = vmatpush.bf16.msra.mxu0 %v729
        %1271 = vmatpush.bf16.msra.mxu0 %v725
        %1272 = vmatmul.bf16.gmra.mxu0 %v436
        %v1273 = vpop.f32.mrf.mxu0
        %v1274 = vadd.f32 %v1185, %v1273
        %v1275 = vpop.f32.mrf.mxu0
        %v1276 = vadd.f32 %v1187, %v1275
        %1277 = vmatmul.bf16.gmra.mxu0 %v438
        %v1278 = vpop.f32.mrf.mxu0
        %v1279 = vadd.f32 %v1190, %v1278
        %v1280 = vpop.f32.mrf.mxu0
        %v1281 = vadd.f32 %v1192, %v1280
        %1282 = vmatmul.bf16.gmra.mxu0 %v440
        %v1283 = vpop.f32.mrf.mxu0
        %v1284 = vadd.f32 %v1195, %v1283
        %v1285 = vpop.f32.mrf.mxu0
        %v1286 = vadd.f32 %v1197, %v1285
        %1287 = vmatmul.bf16.gmra.mxu0 %v442
        %v1288 = vpop.f32.mrf.mxu0
        %v1289 = vadd.f32 %v1200, %v1288
        %v1290 = vpop.f32.mrf.mxu0
        %v1291 = vadd.f32 %v1202, %v1290
        %1292 = vmatmul.bf16.gmra.mxu0 %v444
        %v1293 = vpop.f32.mrf.mxu0
        %v1294 = vadd.f32 %v1205, %v1293
        %v1295 = vpop.f32.mrf.mxu0
        %v1296 = vadd.f32 %v1207, %v1295
        %1297 = vmatmul.bf16.gmra.mxu0 %v446
        %v1298 = vpop.f32.mrf.mxu0
        %v1299 = vadd.f32 %v1210, %v1298
        %v1300 = vpop.f32.mrf.mxu0
        %v1301 = vadd.f32 %v1212, %v1300
        %1302 = vmatmul.bf16.gmra.mxu0 %v448
        %v1303 = vpop.f32.mrf.mxu0
        %v1304 = vadd.f32 %v1215, %v1303
        %v1305 = vpop.f32.mrf.mxu0
        %v1306 = vadd.f32 %v1217, %v1305
        %1307 = vmatmul.bf16.gmra.mxu0 %v450
        %v1308 = vpop.f32.mrf.mxu0
        %v1309 = vadd.f32 %v1220, %v1308
        %v1310 = vpop.f32.mrf.mxu0
        %v1311 = vadd.f32 %v1222, %v1310
        %1312 = vmatmul.bf16.gmra.mxu0 %v452
        %v1313 = vpop.f32.mrf.mxu0
        %v1314 = vadd.f32 %v1225, %v1313
        %v1315 = vpop.f32.mrf.mxu0
        %v1316 = vadd.f32 %v1227, %v1315
        %1317 = vmatmul.bf16.gmra.mxu0 %v454
        %v1318 = vpop.f32.mrf.mxu0
        %v1319 = vadd.f32 %v1230, %v1318
        %v1320 = vpop.f32.mrf.mxu0
        %v1321 = vadd.f32 %v1232, %v1320
        %1322 = vmatmul.bf16.gmra.mxu0 %v456
        %v1323 = vpop.f32.mrf.mxu0
        %v1324 = vadd.f32 %v1235, %v1323
        %v1325 = vpop.f32.mrf.mxu0
        %v1326 = vadd.f32 %v1237, %v1325
        %1327 = vmatmul.bf16.gmra.mxu0 %v458
        %v1328 = vpop.f32.mrf.mxu0
        %v1329 = vadd.f32 %v1240, %v1328
        %v1330 = vpop.f32.mrf.mxu0
        %v1331 = vadd.f32 %v1242, %v1330
        %1332 = vmatmul.bf16.gmra.mxu0 %v460
        %v1333 = vpop.f32.mrf.mxu0
        %v1334 = vadd.f32 %v1245, %v1333
        %v1335 = vpop.f32.mrf.mxu0
        %v1336 = vadd.f32 %v1247, %v1335
        %1337 = vmatmul.bf16.gmra.mxu0 %v462
        %v1338 = vpop.f32.mrf.mxu0
        %v1339 = vadd.f32 %v1250, %v1338
        %v1340 = vpop.f32.mrf.mxu0
        %v1341 = vadd.f32 %v1252, %v1340
        %1342 = vmatmul.bf16.gmra.mxu0 %v464
        %v1343 = vpop.f32.mrf.mxu0
        %v1344 = vadd.f32 %v1255, %v1343
        %v1345 = vpop.f32.mrf.mxu0
        %v1346 = vadd.f32 %v1257, %v1345
        %1347 = vmatmul.bf16.gmra.mxu0 %v466
        %v1348 = vpop.f32.mrf.mxu0
        %v1349 = vadd.f32 %v1260, %v1348
        %v1350 = vpop.f32.mrf.mxu0
        %v1351 = vadd.f32 %v1262, %v1350
        %1352 = vdwg.mxu0
        %1353 = vmatpush.bf16.msra.mxu0 %v722
        %1354 = vmatpush.bf16.msra.mxu0 %v718
        %1355 = vmatpush.bf16.msra.mxu0 %v714
        %1356 = vmatpush.bf16.msra.mxu0 %v710
        %1357 = vmatpush.bf16.msra.mxu0 %v706
        %1358 = vmatpush.bf16.msra.mxu0 %v702
        %1359 = vmatpush.bf16.msra.mxu0 %v698
        %1360 = vmatpush.bf16.msra.mxu0 %v694
        %1361 = vmatmul.bf16.gmra.mxu0 %v435
        %v1362 = vpop.f32.mrf.mxu0
        %v1363 = vadd.f32 0.0, %v1362
        %v1364 = vpop.f32.mrf.mxu0
        %v1365 = vadd.f32 0.0, %v1364
        %1366 = vmatmul.bf16.gmra.mxu0 %v437
        %v1367 = vpop.f32.mrf.mxu0
        %v1368 = vadd.f32 0.0, %v1367
        %v1369 = vpop.f32.mrf.mxu0
        %v1370 = vadd.f32 0.0, %v1369
        %1371 = vmatmul.bf16.gmra.mxu0 %v439
        %v1372 = vpop.f32.mrf.mxu0
        %v1373 = vadd.f32 0.0, %v1372
        %v1374 = vpop.f32.mrf.mxu0
        %v1375 = vadd.f32 0.0, %v1374
        %1376 = vmatmul.bf16.gmra.mxu0 %v441
        %v1377 = vpop.f32.mrf.mxu0
        %v1378 = vadd.f32 0.0, %v1377
        %v1379 = vpop.f32.mrf.mxu0
        %v1380 = vadd.f32 0.0, %v1379
        %1381 = vmatmul.bf16.gmra.mxu0 %v443
        %v1382 = vpop.f32.mrf.mxu0
        %v1383 = vadd.f32 0.0, %v1382
        %v1384 = vpop.f32.mrf.mxu0
        %v1385 = vadd.f32 0.0, %v1384
        %1386 = vmatmul.bf16.gmra.mxu0 %v445
        %v1387 = vpop.f32.mrf.mxu0
        %v1388 = vadd.f32 0.0, %v1387
        %v1389 = vpop.f32.mrf.mxu0
        %v1390 = vadd.f32 0.0, %v1389
        %1391 = vmatmul.bf16.gmra.mxu0 %v447
        %v1392 = vpop.f32.mrf.mxu0
        %v1393 = vadd.f32 0.0, %v1392
        %v1394 = vpop.f32.mrf.mxu0
        %v1395 = vadd.f32 0.0, %v1394
        %1396 = vmatmul.bf16.gmra.mxu0 %v449
        %v1397 = vpop.f32.mrf.mxu0
        %v1398 = vadd.f32 0.0, %v1397
        %v1399 = vpop.f32.mrf.mxu0
        %v1400 = vadd.f32 0.0, %v1399
        %1401 = vmatmul.bf16.gmra.mxu0 %v451
        %v1402 = vpop.f32.mrf.mxu0
        %v1403 = vadd.f32 0.0, %v1402
        %v1404 = vpop.f32.mrf.mxu0
        %v1405 = vadd.f32 0.0, %v1404
        %1406 = vmatmul.bf16.gmra.mxu0 %v453
        %v1407 = vpop.f32.mrf.mxu0
        %v1408 = vadd.f32 0.0, %v1407
        %v1409 = vpop.f32.mrf.mxu0
        %v1410 = vadd.f32 0.0, %v1409
        %1411 = vmatmul.bf16.gmra.mxu0 %v455
        %v1412 = vpop.f32.mrf.mxu0
        %v1413 = vadd.f32 0.0, %v1412
        %v1414 = vpop.f32.mrf.mxu0
        %v1415 = vadd.f32 0.0, %v1414
        %1416 = vmatmul.bf16.gmra.mxu0 %v457
        %v1417 = vpop.f32.mrf.mxu0
        %v1418 = vadd.f32 0.0, %v1417
        %v1419 = vpop.f32.mrf.mxu0
        %v1420 = vadd.f32 0.0, %v1419
        %1421 = vmatmul.bf16.gmra.mxu0 %v459
        %v1422 = vpop.f32.mrf.mxu0
        %v1423 = vadd.f32 0.0, %v1422
        %v1424 = vpop.f32.mrf.mxu0
        %v1425 = vadd.f32 0.0, %v1424
        %1426 = vmatmul.bf16.gmra.mxu0 %v461
        %v1427 = vpop.f32.mrf.mxu0
        %v1428 = vadd.f32 0.0, %v1427
        %v1429 = vpop.f32.mrf.mxu0
        %v1430 = vadd.f32 0.0, %v1429
        %1431 = vmatmul.bf16.gmra.mxu0 %v463
        %v1432 = vpop.f32.mrf.mxu0
        %v1433 = vadd.f32 0.0, %v1432
        %v1434 = vpop.f32.mrf.mxu0
        %v1435 = vadd.f32 0.0, %v1434
        %1436 = vmatmul.bf16.gmra.mxu0 %v465
        %v1437 = vpop.f32.mrf.mxu0
        %v1438 = vadd.f32 0.0, %v1437
        %v1439 = vpop.f32.mrf.mxu0
        %v1440 = vadd.f32 0.0, %v1439
        %1441 = vdwg.mxu0
        %1442 = vmatpush.bf16.msra.mxu0 %v754
        %1443 = vmatpush.bf16.msra.mxu0 %v750
        %1444 = vmatpush.bf16.msra.mxu0 %v746
        %1445 = vmatpush.bf16.msra.mxu0 %v742
        %1446 = vmatpush.bf16.msra.mxu0 %v738
        %1447 = vmatpush.bf16.msra.mxu0 %v734
        %1448 = vmatpush.bf16.msra.mxu0 %v730
        %1449 = vmatpush.bf16.msra.mxu0 %v726
        %1450 = vmatmul.bf16.gmra.mxu0 %v436
        %v1451 = vpop.f32.mrf.mxu0
        %v1452 = vadd.f32 %v1363, %v1451
        %v1453 = vpop.f32.mrf.mxu0
        %v1454 = vadd.f32 %v1365, %v1453
        %1455 = vmatmul.bf16.gmra.mxu0 %v438
        %v1456 = vpop.f32.mrf.mxu0
        %v1457 = vadd.f32 %v1368, %v1456
        %v1458 = vpop.f32.mrf.mxu0
        %v1459 = vadd.f32 %v1370, %v1458
        %1460 = vmatmul.bf16.gmra.mxu0 %v440
        %v1461 = vpop.f32.mrf.mxu0
        %v1462 = vadd.f32 %v1373, %v1461
        %v1463 = vpop.f32.mrf.mxu0
        %v1464 = vadd.f32 %v1375, %v1463
        %1465 = vmatmul.bf16.gmra.mxu0 %v442
        %v1466 = vpop.f32.mrf.mxu0
        %v1467 = vadd.f32 %v1378, %v1466
        %v1468 = vpop.f32.mrf.mxu0
        %v1469 = vadd.f32 %v1380, %v1468
        %1470 = vmatmul.bf16.gmra.mxu0 %v444
        %v1471 = vpop.f32.mrf.mxu0
        %v1472 = vadd.f32 %v1383, %v1471
        %v1473 = vpop.f32.mrf.mxu0
        %v1474 = vadd.f32 %v1385, %v1473
        %1475 = vmatmul.bf16.gmra.mxu0 %v446
        %v1476 = vpop.f32.mrf.mxu0
        %v1477 = vadd.f32 %v1388, %v1476
        %v1478 = vpop.f32.mrf.mxu0
        %v1479 = vadd.f32 %v1390, %v1478
        %1480 = vmatmul.bf16.gmra.mxu0 %v448
        %v1481 = vpop.f32.mrf.mxu0
        %v1482 = vadd.f32 %v1393, %v1481
        %v1483 = vpop.f32.mrf.mxu0
        %v1484 = vadd.f32 %v1395, %v1483
        %1485 = vmatmul.bf16.gmra.mxu0 %v450
        %v1486 = vpop.f32.mrf.mxu0
        %v1487 = vadd.f32 %v1398, %v1486
        %v1488 = vpop.f32.mrf.mxu0
        %v1489 = vadd.f32 %v1400, %v1488
        %1490 = vmatmul.bf16.gmra.mxu0 %v452
        %v1491 = vpop.f32.mrf.mxu0
        %v1492 = vadd.f32 %v1403, %v1491
        %v1493 = vpop.f32.mrf.mxu0
        %v1494 = vadd.f32 %v1405, %v1493
        %1495 = vmatmul.bf16.gmra.mxu0 %v454
        %v1496 = vpop.f32.mrf.mxu0
        %v1497 = vadd.f32 %v1408, %v1496
        %v1498 = vpop.f32.mrf.mxu0
        %v1499 = vadd.f32 %v1410, %v1498
        %1500 = vmatmul.bf16.gmra.mxu0 %v456
        %v1501 = vpop.f32.mrf.mxu0
        %v1502 = vadd.f32 %v1413, %v1501
        %v1503 = vpop.f32.mrf.mxu0
        %v1504 = vadd.f32 %v1415, %v1503
        %1505 = vmatmul.bf16.gmra.mxu0 %v458
        %v1506 = vpop.f32.mrf.mxu0
        %v1507 = vadd.f32 %v1418, %v1506
        %v1508 = vpop.f32.mrf.mxu0
        %v1509 = vadd.f32 %v1420, %v1508
        %1510 = vmatmul.bf16.gmra.mxu0 %v460
        %v1511 = vpop.f32.mrf.mxu0
        %v1512 = vadd.f32 %v1423, %v1511
        %v1513 = vpop.f32.mrf.mxu0
        %v1514 = vadd.f32 %v1425, %v1513
        %1515 = vmatmul.bf16.gmra.mxu0 %v462
        %v1516 = vpop.f32.mrf.mxu0
        %v1517 = vadd.f32 %v1428, %v1516
        %v1518 = vpop.f32.mrf.mxu0
        %v1519 = vadd.f32 %v1430, %v1518
        %1520 = vmatmul.bf16.gmra.mxu0 %v464
        %v1521 = vpop.f32.mrf.mxu0
        %v1522 = vadd.f32 %v1433, %v1521
        %v1523 = vpop.f32.mrf.mxu0
        %v1524 = vadd.f32 %v1435, %v1523
        %1525 = vmatmul.bf16.gmra.mxu0 %v466
        %v1526 = vpop.f32.mrf.mxu0
        %v1527 = vadd.f32 %v1438, %v1526
        %v1528 = vpop.f32.mrf.mxu0
        %v1529 = vadd.f32 %v1440, %v1528
        %1530 = vdwg.mxu0
        %v1531 = vpack.c.bf16 %v1096, %v918
        %v1532 = vpack.c.bf16 %v1098, %v920
        %v1533 = vpack.c.bf16 %v1101, %v923
        %v1534 = vpack.c.bf16 %v1103, %v925
        %v1535 = vpack.c.bf16 %v1106, %v928
        %v1536 = vpack.c.bf16 %v1108, %v930
        %v1537 = vpack.c.bf16 %v1111, %v933
        %v1538 = vpack.c.bf16 %v1113, %v935
        %v1539 = vpack.c.bf16 %v1116, %v938
        %v1540 = vpack.c.bf16 %v1118, %v940
        %v1541 = vpack.c.bf16 %v1121, %v943
        %v1542 = vpack.c.bf16 %v1123, %v945
        %v1543 = vpack.c.bf16 %v1126, %v948
        %v1544 = vpack.c.bf16 %v1128, %v950
        %v1545 = vpack.c.bf16 %v1131, %v953
        %v1546 = vpack.c.bf16 %v1133, %v955
        %v1547 = vpack.c.bf16 %v1136, %v958
        %v1548 = vpack.c.bf16 %v1138, %v960
        %v1549 = vpack.c.bf16 %v1141, %v963
        %v1550 = vpack.c.bf16 %v1143, %v965
        %v1551 = vpack.c.bf16 %v1146, %v968
        %v1552 = vpack.c.bf16 %v1148, %v970
        %v1553 = vpack.c.bf16 %v1151, %v973
        %v1554 = vpack.c.bf16 %v1153, %v975
        %v1555 = vpack.c.bf16 %v1156, %v978
        %v1556 = vpack.c.bf16 %v1158, %v980
        %v1557 = vpack.c.bf16 %v1161, %v983
        %v1558 = vpack.c.bf16 %v1163, %v985
        %v1559 = vpack.c.bf16 %v1166, %v988
        %v1560 = vpack.c.bf16 %v1168, %v990
        %v1561 = vpack.c.bf16 %v1171, %v993
        %v1562 = vpack.c.bf16 %v1173, %v995
        %1563 = vst [vmem:[%s232] sm:$0xff] %v1531
        %1564 = vst [vmem:[%s232 + $0x8] sm:$0xff] %v1532
        %1565 = vst [vmem:[%s232 + $0x10] sm:$0xff] %v1533
        %1566 = vst [vmem:[%s232 + $0x18] sm:$0xff] %v1534
        %1567 = vst [vmem:[%s232 + $0x20] sm:$0xff] %v1535
        %1568 = vst [vmem:[%s232 + $0x28] sm:$0xff] %v1536
        %1569 = vst [vmem:[%s232 + $0x30] sm:$0xff] %v1537
        %1570 = vst [vmem:[%s232 + $0x38] sm:$0xff] %v1538
        %1571 = vst [vmem:[%s232 + $0x40] sm:$0xff] %v1539
        %1572 = vst [vmem:[%s232 + $0x48] sm:$0xff] %v1540
        %1573 = vst [vmem:[%s232 + $0x50] sm:$0xff] %v1541
        %1574 = vst [vmem:[%s232 + $0x58] sm:$0xff] %v1542
        %1575 = vst [vmem:[%s232 + $0x60] sm:$0xff] %v1543
        %1576 = vst [vmem:[%s232 + $0x68] sm:$0xff] %v1544
        %1577 = vst [vmem:[%s232 + $0x70] sm:$0xff] %v1545
        %1578 = vst [vmem:[%s232 + $0x78] sm:$0xff] %v1546
        %1579 = vst [vmem:[%s232 + $0x80] sm:$0xff] %v1547
        %1580 = vst [vmem:[%s232 + $0x88] sm:$0xff] %v1548
        %1581 = vst [vmem:[%s232 + $0x90] sm:$0xff] %v1549
        %1582 = vst [vmem:[%s232 + $0x98] sm:$0xff] %v1550
        %1583 = vst [vmem:[%s232 + $0xa0] sm:$0xff] %v1551
        %1584 = vst [vmem:[%s232 + $0xa8] sm:$0xff] %v1552
        %1585 = vst [vmem:[%s232 + $0xb0] sm:$0xff] %v1553
        %1586 = vst [vmem:[%s232 + $0xb8] sm:$0xff] %v1554
        %1587 = vst [vmem:[%s232 + $0xc0] sm:$0xff] %v1555
        %1588 = vst [vmem:[%s232 + $0xc8] sm:$0xff] %v1556
        %1589 = vst [vmem:[%s232 + $0xd0] sm:$0xff] %v1557
        %1590 = vst [vmem:[%s232 + $0xd8] sm:$0xff] %v1558
        %1591 = vst [vmem:[%s232 + $0xe0] sm:$0xff] %v1559
        %1592 = vst [vmem:[%s232 + $0xe8] sm:$0xff] %v1560
        %1593 = vst [vmem:[%s232 + $0xf0] sm:$0xff] %v1561
        %1594 = vst [vmem:[%s232 + $0xf8] sm:$0xff] %v1562
        %v1595 = vpack.c.bf16 %v1452, %v1274
        %v1596 = vpack.c.bf16 %v1454, %v1276
        %v1597 = vpack.c.bf16 %v1457, %v1279
        %v1598 = vpack.c.bf16 %v1459, %v1281
        %v1599 = vpack.c.bf16 %v1462, %v1284
        %v1600 = vpack.c.bf16 %v1464, %v1286
        %v1601 = vpack.c.bf16 %v1467, %v1289
        %v1602 = vpack.c.bf16 %v1469, %v1291
        %v1603 = vpack.c.bf16 %v1472, %v1294
        %v1604 = vpack.c.bf16 %v1474, %v1296
        %v1605 = vpack.c.bf16 %v1477, %v1299
        %v1606 = vpack.c.bf16 %v1479, %v1301
        %v1607 = vpack.c.bf16 %v1482, %v1304
        %v1608 = vpack.c.bf16 %v1484, %v1306
        %v1609 = vpack.c.bf16 %v1487, %v1309
        %v1610 = vpack.c.bf16 %v1489, %v1311
        %v1611 = vpack.c.bf16 %v1492, %v1314
        %v1612 = vpack.c.bf16 %v1494, %v1316
        %v1613 = vpack.c.bf16 %v1497, %v1319
        %v1614 = vpack.c.bf16 %v1499, %v1321
        %v1615 = vpack.c.bf16 %v1502, %v1324
        %v1616 = vpack.c.bf16 %v1504, %v1326
        %v1617 = vpack.c.bf16 %v1507, %v1329
        %v1618 = vpack.c.bf16 %v1509, %v1331
        %v1619 = vpack.c.bf16 %v1512, %v1334
        %v1620 = vpack.c.bf16 %v1514, %v1336
        %v1621 = vpack.c.bf16 %v1517, %v1339
        %v1622 = vpack.c.bf16 %v1519, %v1341
        %v1623 = vpack.c.bf16 %v1522, %v1344
        %v1624 = vpack.c.bf16 %v1524, %v1346
        %v1625 = vpack.c.bf16 %v1527, %v1349
        %v1626 = vpack.c.bf16 %v1529, %v1351
        %1627 = vst [vmem:[%s239] sm:$0xff] %v1595
        %1628 = vst [vmem:[%s239 + $0x8] sm:$0xff] %v1596
        %1629 = vst [vmem:[%s239 + $0x10] sm:$0xff] %v1597
        %1630 = vst [vmem:[%s239 + $0x18] sm:$0xff] %v1598
        %1631 = vst [vmem:[%s239 + $0x20] sm:$0xff] %v1599
        %1632 = vst [vmem:[%s239 + $0x28] sm:$0xff] %v1600
        %1633 = vst [vmem:[%s239 + $0x30] sm:$0xff] %v1601
        %1634 = vst [vmem:[%s239 + $0x38] sm:$0xff] %v1602
        %1635 = vst [vmem:[%s239 + $0x40] sm:$0xff] %v1603
        %1636 = vst [vmem:[%s239 + $0x48] sm:$0xff] %v1604
        %1637 = vst [vmem:[%s239 + $0x50] sm:$0xff] %v1605
        %1638 = vst [vmem:[%s239 + $0x58] sm:$0xff] %v1606
        %1639 = vst [vmem:[%s239 + $0x60] sm:$0xff] %v1607
        %1640 = vst [vmem:[%s239 + $0x68] sm:$0xff] %v1608
        %1641 = vst [vmem:[%s239 + $0x70] sm:$0xff] %v1609
        %1642 = vst [vmem:[%s239 + $0x78] sm:$0xff] %v1610
        %1643 = vst [vmem:[%s239 + $0x80] sm:$0xff] %v1611
        %1644 = vst [vmem:[%s239 + $0x88] sm:$0xff] %v1612
        %1645 = vst [vmem:[%s239 + $0x90] sm:$0xff] %v1613
        %1646 = vst [vmem:[%s239 + $0x98] sm:$0xff] %v1614
        %1647 = vst [vmem:[%s239 + $0xa0] sm:$0xff] %v1615
        %1648 = vst [vmem:[%s239 + $0xa8] sm:$0xff] %v1616
        %1649 = vst [vmem:[%s239 + $0xb0] sm:$0xff] %v1617
        %1650 = vst [vmem:[%s239 + $0xb8] sm:$0xff] %v1618
        %1651 = vst [vmem:[%s239 + $0xc0] sm:$0xff] %v1619
        %1652 = vst [vmem:[%s239 + $0xc8] sm:$0xff] %v1620
        %1653 = vst [vmem:[%s239 + $0xd0] sm:$0xff] %v1621
        %1654 = vst [vmem:[%s239 + $0xd8] sm:$0xff] %v1622
        %1655 = vst [vmem:[%s239 + $0xe0] sm:$0xff] %v1623
        %1656 = vst [vmem:[%s239 + $0xe8] sm:$0xff] %v1624
        %1657 = vst [vmem:[%s239 + $0xf0] sm:$0xff] %v1625
        %1658 = vst [vmem:[%s239 + $0xf8] sm:$0xff] %v1626
        %s1659 = sand.u32 %s96, 1
        %s1660 = scalar_lea.sflag [#allocation4], %s1659
        %s1661 = sand.u32 %s96, 1
        %s1662 = smul.addr %s1661, 256
        %s1663 = scalar_lea.vmem [#allocation7], %s1662
        %s1664 = sand.u32 %s124, 1
        %s1665 = scalar_lea.sflag [#allocation9], %s1664
        %s1666 = sand.u32 %s124, 1
        %s1667 = smul.addr %s1666, 256
        %s1668 = scalar_lea.vmem [#allocation8], %s1667
        // Predicated region
        $region37: #{tpu_custom_call.1} parent=27 // pred_check
          %p1669 = pneg %p106
        $region38: #{tpu_custom_call.1} parent=27 // pred_check_branch
          %1671 = sbr.rel (%p1669) target = $region40
        $region39: #{tpu_custom_call.1} parent=27 // pred_region
          %s1672 = smul.u32 32, %s30
          %1674 = vsyncadd %s1660, 0
          %s1675 = smul.addr %s1672, 2
          %s1676 = smul.addr %s29, 128
          %s1677 = sadd.s32 %s1675, %s1676
          %s1678 = smul.addr %s1677, 4
          %s1679 = scalar_lea.hbm %s2, %s1678
          %s1680 = sshll.u32 %s1663, 4
          %s1681 = int_to_ptr.vmem [resolvable:$true] %s1680
          %s1682 = sshll.u32 %s1679, 4
          %s1683 = int_to_ptr.hbm [resolvable:$true] %s1682
          %1688 = dma.vmem_to_hbm [thread:$0]  %s1681, 4096, %s1683, %s1660, 128, 128, 8
        $region40: #{tpu_custom_call.1} parent=27 // pred_fallthru
          _
        // Predicated region
        $region41: #{tpu_custom_call.1} parent=27 // pred_check
          %p1689 = pneg %p134
        $region42: #{tpu_custom_call.1} parent=27 // pred_check_branch
          %1691 = sbr.rel (%p1689) target = $region44
        $region43: #{tpu_custom_call.1} parent=27 // pred_region
          %s1692 = smul.u32 32, %s30
          %1694 = vsyncadd %s1665, 0
          %s1695 = smul.addr %s1692, 2
          %s1696 = smul.addr %s29, 128
          %s1697 = sadd.s32 %s1695, %s1696
          %s1698 = smul.addr %s1697, 4
          %s1699 = scalar_lea.hbm %s3, %s1698
          %s1700 = sshll.u32 %s1668, 4
          %s1701 = int_to_ptr.vmem [resolvable:$true] %s1700
          %s1702 = sshll.u32 %s1699, 4
          %s1703 = int_to_ptr.hbm [resolvable:$true] %s1702
          %1708 = dma.vmem_to_hbm [thread:$0]  %s1701, 4096, %s1703, %s1665, 128, 128, 8
        $region44: #{tpu_custom_call.1} parent=27 // pred_fallthru
          _
      $region28: #{tpu_custom_call.1} parent=5 // pred_fallthru
        _
      %p1709 = scmp.le.s32.totalorder 2, %s20
      // Predicated region
      $region45: #{tpu_custom_call.1} parent=5 // pred_check
        %p1710 = pneg %p1709
      $region46: #{tpu_custom_call.1} parent=5 // pred_check_branch
        %1712 = sbr.rel (%p1710) target = $region48
      $region47: #{tpu_custom_call.1} parent=5 // pred_region
        %s1713 = ssub.s32 %s20, 2
        // Predicated region
        $region49: #{tpu_custom_call.1} parent=47 // pred_check
          %p1714 = pneg %p112
        $region50: #{tpu_custom_call.1} parent=47 // pred_check_branch
          %1716 = sbr.rel (%p1714) target = $region52
        $region51: #{tpu_custom_call.1} parent=47 // pred_region
          %s1717 = sand.u32 %s97, 1
          %s1718 = scalar_lea.sflag [#allocation4], %s1717
          %s1719 = sand.u32 %s97, 1
          %s1720 = smul.addr %s1719, 256
          %s1721 = scalar_lea.vmem [#allocation7], %s1720
          %1723 = dma.done %s1718, 4096
        $region52: #{tpu_custom_call.1} parent=47 // pred_fallthru
          _
        // Predicated region
        $region53: #{tpu_custom_call.1} parent=47 // pred_check
          %p1724 = pneg %p140
        $region54: #{tpu_custom_call.1} parent=47 // pred_check_branch
          %1726 = sbr.rel (%p1724) target = $region56
        $region55: #{tpu_custom_call.1} parent=47 // pred_region
          %s1727 = sand.u32 %s125, 1
          %s1728 = scalar_lea.sflag [#allocation9], %s1727
          %s1729 = sand.u32 %s125, 1
          %s1730 = smul.addr %s1729, 256
          %s1731 = scalar_lea.vmem [#allocation8], %s1730
          %1733 = dma.done %s1728, 4096
        $region56: #{tpu_custom_call.1} parent=47 // pred_fallthru
          _
      $region48: #{tpu_custom_call.1} parent=5 // pred_fallthru
        _
    $region6: #{tpu_custom_call.1} parent=1 // loop_footer
      %s24 = sadd.s32 1, %s20
    $region7: #{tpu_custom_call.1} parent=1 // loop_footer_branch
      %19 = sbr.rel target = $region3
    $region8: #{tpu_custom_call.1} parent=1 // loop_exit
      _
    %1734 = vsyncpa [#allocation3], 1
    %s1735 = scalar_lea.sflag [#allocation3], 1
    %1736 = vsyncpa %s1735, 1
    %1737 = vsyncpa [#allocation6], 1
    %1738 = vsyncpa [#allocation4], 1
    %s1739 = scalar_lea.sflag [#allocation4], 1
    %1740 = vsyncpa %s1739, 1
    %1741 = vsyncpa [#allocation9], 1
    %s1742 = scalar_lea.sflag [#allocation9], 1
    %1743 = vsyncpa %s1742, 1

</llo_original>
